<compile_context>
chip_gen: v5e
topology: v5e:2x2
jax: 0.10.0
libtpu: 0.0.40
codegen_flags: <defaults>
</compile_context>

<pallas_src>
import functools

import jax
import jax.numpy as jnp
from jax import lax
from jax.experimental import pallas as pl
from jax.experimental.pallas import tpu as pltpu


def _stable_softplus(x):
    # -logsigmoid(d) == softplus(-d); numerically stable form.
    return jnp.maximum(x, 0.0) + jnp.log1p(jnp.exp(-jnp.abs(x)))


def _scoring_kernel(p1_ref, p2_ref, n1_ref, n2_ref, t_ref, s_ref, o_ref, *,
                    inv_temp, valid_rows):
    """One batch tile: dot scores + BPR-loss partial sum -> private out block.

    n1_ref / n2_ref are lane-dense (tb, N*D) slabs.  The per-D reduces are done
    on the MXU with two static 0/1 matrices:
      t_ref: (D, N*D)   replicates a (tb, D) row across the N segments
      s_ref: (N*D, N)   sums each length-D segment
    """
    tb = p1_ref.shape[0]
    hi = lax.Precision.HIGHEST  # keep MXU accumulation at ~f32 precision

    p1 = p1_ref[...]                      # (tb, D)
    p2 = p2_ref[...]                      # (tb, D)
    t = t_ref[...]                        # (D, N*D)
    s = s_ref[...]                        # (N*D, N)
    n1 = n1_ref[...]                      # (tb, N*D)
    n2 = n2_ref[...]                      # (tb, N*D)

    # Positive score: small (tb, D) elementwise mul + lane reduce.
    p_score = jnp.sum(p1.astype(jnp.float32) * p2.astype(jnp.float32),
                      axis=-1, keepdims=True) * inv_temp                # (tb, 1)

    # Replicate p1/p2 across the N negative segments on the MXU (exact 0/1 mat).
    p2_rep = jnp.dot(p2, t, preferred_element_type=jnp.float32,
                     precision=hi).astype(n1.dtype)                     # (tb, N*D)
    p1_rep = jnp.dot(p1, t, preferred_element_type=jnp.float32,
                     precision=hi).astype(n2.dtype)                     # (tb, N*D)

    # Big elementwise products stay in the input dtype (bf16 on v6e/v7x);
    # the segment reduce accumulates in f32 on the MXU.
    n1_score = jnp.dot(n1 * p2_rep, s, preferred_element_type=jnp.float32,
                       precision=hi) * inv_temp                         # (tb, N)
    n2_score = jnp.dot(n2 * p1_rep, s, preferred_element_type=jnp.float32,
                       precision=hi) * inv_temp                         # (tb, N)

    # bpr_loss elements for both negative streams (reduce='mean' folded later).
    l = _stable_softplus(-(p_score - n2_score)) \
        + _stable_softplus(-(p_score - n1_score))                       # (tb, N)

    if valid_rows is not None:
        # Mask batch-padding rows added by the wrapper.
        row = pl.program_id(0) * tb + lax.broadcasted_iota(jnp.int32, (tb, 1), 0)
        l = jnp.where(row < valid_rows, l, 0.0)

    # Per-tile partial sum into this tile's private (1, 8, 128) output block:
    # no cross-step accumulator -> the grid axis stays "parallel" (megacore OK).
    o_ref[...] = jnp.full(o_ref.shape, jnp.sum(l), dtype=jnp.float32)


def _segment_matrices(n_neg, d, dtype):
    """(D, N*D) replication matrix and (N*D, N) segment-sum matrix (0/1)."""
    nd = n_neg * d
    within = jnp.arange(nd) % d
    segment = jnp.arange(nd) // d
    t = (jnp.arange(d)[:, None] == within[None, :]).astype(dtype)       # (D, N*D)
    s = (segment[:, None] == jnp.arange(n_neg)[None, :]).astype(dtype)  # (N*D, N)
    return t, s


def _pick_batch_tile(b, nd, d, itemsize, sublane, budget_bytes, min_tiles=4):
    """Largest sublane-aligned batch tile whose per-tile working set
    (double-buffered streamed inputs + f32 temporaries) fits the budget,
    additionally capped so the grid keeps >= min_tiles steps when B allows."""
    d_pad = -(-d // 128) * 128
    # per batch row: 2x(double-buffer) * (n1+n2+p1+p2) streamed bytes
    #                + ~4 f32 temporaries of width N*D (products / replicas).
    per_row = 2 * (2 * nd + 2 * d_pad) * itemsize + 4 * nd * 4
    tb = max(sublane, (budget_bytes // per_row) // sublane * sublane)
    cap = max(sublane, (-(-b // min_tiles) + sublane - 1) // sublane * sublane)
    return int(min(tb, cap))


def _vmem_limit_bytes():
    """Generation-aware scoped-VMEM limit (<= ~50% of per-core capacity)."""
    try:
        cap = int(pltpu.get_tpu_info().vmem_capacity_bytes)
    except Exception:  # older jax / no hardware info available
        cap = 128 << 20
    return int(max(16 << 20, min(64 << 20, cap // 2)))


def scoring_forward(p1_feat, p2_feat, n1_feat, n2_feat, relation, *,
                    temp=1.0, tb=None, tile_budget_bytes=2 << 20):
    """Pallas-backed Scoring.forward (dot score, bpr loss, rel='none')."""
    del relation  # identity rel_transform, no rel_weight, Monitor skipped
    B, D = p1_feat.shape
    _, N, _ = n1_feat.shape
    ND = N * D
    dtype = p1_feat.dtype
    itemsize = jnp.dtype(dtype).itemsize
    sublane = 8 * max(1, 4 // itemsize)        # 8 rows for f32, 16 for bf16

    if tb is None:
        tb = _pick_batch_tile(B, ND, D, itemsize, sublane, tile_budget_bytes)

    # Pad the batch to a multiple of tb (pad rows are masked in the kernel).
    B_pad = -(-B // tb) * tb
    num_tiles = B_pad // tb

    # Lane-dense [B, N*D] slabs for the dominant streams (free reshape).
    n1f = n1_feat.reshape(B, ND)
    n2f = n2_feat.reshape(B, ND)
    p1, p2 = p1_feat, p2_feat
    if B_pad != B:
        pad = ((0, B_pad - B), (0, 0))
        p1, p2 = jnp.pad(p1, pad), jnp.pad(p2, pad)
        n1f, n2f = jnp.pad(n1f, pad), jnp.pad(n2f, pad)

    t_mat, s_mat = _segment_matrices(N, D, dtype)

    kernel = functools.partial(
        _scoring_kernel,
        inv_temp=1.0 / float(temp),
        valid_rows=None if B_pad == B else B,
    )

    in_bytes = (2 * B_pad * D + 2 * B_pad * ND + D * ND + ND * N) * itemsize
    out_bytes = num_tiles * 8 * 128 * 4
    cost = pl.CostEstimate(
        flops=(4 * B_pad * D * ND + 4 * B_pad * ND * N + 2 * B_pad * ND
               + 2 * B_pad * D + 8 * B_pad * N),
        transcendentals=4 * B_pad * N,
        bytes_accessed=in_bytes + out_bytes,
    )

    partials = pl.pallas_call(
        kernel,
        out_shape=jax.ShapeDtypeStruct((num_tiles, 8, 128), jnp.float32),
        grid_spec=pltpu.PrefetchScalarGridSpec(
            num_scalar_prefetch=0,
            grid=(num_tiles,),
            in_specs=[
                pl.BlockSpec((tb, D), lambda i: (i, 0)),
                pl.BlockSpec((tb, D), lambda i: (i, 0)),
                pl.BlockSpec((tb, ND), lambda i: (i, 0)),
                pl.BlockSpec((tb, ND), lambda i: (i, 0)),
                pl.BlockSpec((D, ND), lambda i: (0, 0)),   # constant, fetched once
                pl.BlockSpec((ND, N), lambda i: (0, 0)),   # constant, fetched once
            ],
            out_specs=pl.BlockSpec((1, 8, 128), lambda i: (i, 0, 0)),
        ),
        compiler_params=pltpu.CompilerParams(
            dimension_semantics=("parallel",),   # independent tiles -> megacore
            vmem_limit_bytes=_vmem_limit_bytes(),
        ),
        cost_estimate=cost,
    )(p1, p2, n1f, n2f, t_mat, s_mat)

    # (sum over n1 losses + sum over n2 losses) / (B*N) == the two means summed.
    return jnp.sum(partials[:, 0, 0]) / (B * N)


def scoring_forward_ref(p1, p2, n1, n2, temp=1.0):
    """Plain-JAX reference mirroring the PyTorch forward."""
    p_score = jnp.sum(p1 * p2, axis=-1, keepdims=True) / temp            # [B,1]
    n2_score = jnp.sum(p1[:, None, :] * n2, axis=-1) / temp              # [B,N]
    n1_score = jnp.sum(n1 * p2[:, None, :], axis=-1) / temp              # [B,N]
    bpr = lambda ps, ns: jnp.mean(jax.nn.softplus(-(ps - ns)))
    return bpr(p_score, n2_score) + bpr(p_score, n1_score)


if __name__ == "__main__":
    B, N, D = 16, 8, 32
    n_relation = 4

    key = jax.random.PRNGKey(0)
    k1, k2, k3, k4, k5 = jax.random.split(key, 5)
    p1_feat = jax.random.normal(k1, (B, D), dtype=jnp.float32)
    p2_feat = jax.random.normal(k2, (B, D), dtype=jnp.float32)
    n1_feat = jax.random.normal(k3, (B, N, D), dtype=jnp.float32)
    n2_feat = jax.random.normal(k4, (B, N, D), dtype=jnp.float32)
    relation = jax.random.randint(k5, (B,), 0, n_relation, dtype=jnp.int32)

    loss = scoring_forward(p1_feat, p2_feat, n1_feat, n2_feat, relation, temp=1.0)
    loss = jax.block_until_ready(loss)

    loss_ref = scoring_forward_ref(p1_feat, p2_feat, n1_feat, n2_feat, temp=1.0)
    # Tolerance accounts for the MXU segment reduce potentially running at
    # reduced f32 pass precision on some generations (HIGHEST requested).
    assert jnp.allclose(loss, loss_ref, rtol=2e-3, atol=2e-3), (loss, loss_ref)

    print("KERNEL_OK")
</pallas_src>

<mosaic_0001>
module attributes {stable_mosaic.version = 11 : i64} {
  func.func @_scoring_kernel(%arg0: i32, %arg1: memref<8x32xf32, #tpu.memory_space<vmem>>, %arg2: memref<8x32xf32, #tpu.memory_space<vmem>>, %arg3: memref<8x256xf32, #tpu.memory_space<vmem>>, %arg4: memref<8x256xf32, #tpu.memory_space<vmem>>, %arg5: memref<32x256xf32, #tpu.memory_space<vmem>>, %arg6: memref<256x8xf32, #tpu.memory_space<vmem>>, %arg7: memref<1x8x128xf32, #tpu.memory_space<vmem>>) attributes {dimension_semantics = [#tpu.dimension_semantics<parallel>], iteration_bounds = array<i64: 2>, scalar_prefetch = 0 : i64, scratch_operands = 0 : i64, tpu.core_type = #tpu.core_type<tc>, window_params = [{transform_indices = @transform_0, window_bounds = array<i64: 8, 32>}, {transform_indices = @transform_1, window_bounds = array<i64: 8, 32>}, {transform_indices = @transform_2, window_bounds = array<i64: 8, 256>}, {transform_indices = @transform_3, window_bounds = array<i64: 8, 256>}, {pipeline_mode = #tpu.pipeline_mode<synchronous>, transform_indices = @transform_4, window_bounds = array<i64: 32, 256>}, {pipeline_mode = #tpu.pipeline_mode<synchronous>, transform_indices = @transform_5, window_bounds = array<i64: 256, 8>}, {transform_indices = @transform_6, window_bounds = array<i64: 1, 8, 128>}]} {
    %c0 = arith.constant 0 : index
    %c0_0 = arith.constant 0 : index
    %0 = vector.load %arg1[%c0, %c0_0] : memref<8x32xf32, #tpu.memory_space<vmem>>, vector<8x32xf32>
    %c0_1 = arith.constant 0 : index
    %c0_2 = arith.constant 0 : index
    %1 = vector.load %arg2[%c0_1, %c0_2] : memref<8x32xf32, #tpu.memory_space<vmem>>, vector<8x32xf32>
    %c0_3 = arith.constant 0 : index
    %c0_4 = arith.constant 0 : index
    %2 = vector.load %arg5[%c0_3, %c0_4] : memref<32x256xf32, #tpu.memory_space<vmem>>, vector<32x256xf32>
    %c0_5 = arith.constant 0 : index
    %c0_6 = arith.constant 0 : index
    %3 = vector.load %arg6[%c0_5, %c0_6] : memref<256x8xf32, #tpu.memory_space<vmem>>, vector<256x8xf32>
    %c0_7 = arith.constant 0 : index
    %c0_8 = arith.constant 0 : index
    %4 = vector.load %arg3[%c0_7, %c0_8] : memref<8x256xf32, #tpu.memory_space<vmem>>, vector<8x256xf32>
    %c0_9 = arith.constant 0 : index
    %c0_10 = arith.constant 0 : index
    %5 = vector.load %arg4[%c0_9, %c0_10] : memref<8x256xf32, #tpu.memory_space<vmem>>, vector<8x256xf32>
    %6 = arith.mulf %0, %1 : vector<8x32xf32>
    %cst = arith.constant dense<0.000000e+00> : vector<8xf32>
    %7 = vector.multi_reduction <add>, %6, %cst [1] : vector<8x32xf32> to vector<8xf32>
    %8 = vector.shape_cast %7 : vector<8xf32> to vector<8x1xf32>
    %cst_11 = arith.constant 1.000000e+00 : f32
    %9 = vector.broadcast %cst_11 : f32 to vector<8x1xf32>
    %10 = arith.mulf %8, %9 : vector<8x1xf32>
    %cst_12 = arith.constant dense<0.000000e+00> : vector<8x256xf32>
    %11 = tpu.matmul %1, %2, %cst_12 {dimension_numbers = #tpu.dot_dimension_numbers<[1], [0], [0], [1], [0, 0, 1, 1], [], []>, precision = #tpu.contract_precision<fp32>} : vector<8x32xf32>, vector<32x256xf32>, vector<8x256xf32> -> vector<8x256xf32>
    %cst_13 = arith.constant dense<0.000000e+00> : vector<8x256xf32>
    %12 = tpu.matmul %0, %2, %cst_13 {dimension_numbers = #tpu.dot_dimension_numbers<[1], [0], [0], [1], [0, 0, 1, 1], [], []>, precision = #tpu.contract_precision<fp32>} : vector<8x32xf32>, vector<32x256xf32>, vector<8x256xf32> -> vector<8x256xf32>
    %13 = arith.mulf %4, %11 : vector<8x256xf32>
    %cst_14 = arith.constant dense<0.000000e+00> : vector<8x8xf32>
    %14 = tpu.matmul %13, %3, %cst_14 {dimension_numbers = #tpu.dot_dimension_numbers<[1], [0], [0], [1], [0, 0, 1, 1], [], []>, precision = #tpu.contract_precision<fp32>} : vector<8x256xf32>, vector<256x8xf32>, vector<8x8xf32> -> vector<8x8xf32>
    %cst_15 = arith.constant 1.000000e+00 : f32
    %15 = vector.broadcast %cst_15 : f32 to vector<8x8xf32>
    %16 = arith.mulf %14, %15 : vector<8x8xf32>
    %17 = arith.mulf %5, %12 : vector<8x256xf32>
    %cst_16 = arith.constant dense<0.000000e+00> : vector<8x8xf32>
    %18 = tpu.matmul %17, %3, %cst_16 {dimension_numbers = #tpu.dot_dimension_numbers<[1], [0], [0], [1], [0, 0, 1, 1], [], []>, precision = #tpu.contract_precision<fp32>} : vector<8x256xf32>, vector<256x8xf32>, vector<8x8xf32> -> vector<8x8xf32>
    %cst_17 = arith.constant 1.000000e+00 : f32
    %19 = vector.broadcast %cst_17 : f32 to vector<8x8xf32>
    %20 = arith.mulf %18, %19 : vector<8x8xf32>
    %21 = vector.broadcast %10 : vector<8x1xf32> to vector<8x8xf32>
    %22 = arith.subf %21, %20 : vector<8x8xf32>
    %cst_18 = arith.constant 0.000000e+00 : f32
    %23 = vector.broadcast %cst_18 : f32 to vector<8x8xf32>
    %24 = arith.subf %23, %22 : vector<8x8xf32>
    %cst_19 = arith.constant 0.000000e+00 : f32
    %25 = vector.broadcast %cst_19 : f32 to vector<8x8xf32>
    %26 = arith.maximumf %24, %25 : vector<8x8xf32>
    %27 = math.absf %24 : vector<8x8xf32>
    %cst_20 = arith.constant 0.000000e+00 : f32
    %28 = vector.broadcast %cst_20 : f32 to vector<8x8xf32>
    %29 = arith.subf %28, %27 : vector<8x8xf32>
    %30 = math.exp %29 : vector<8x8xf32>
    %31 = math.log1p %30 : vector<8x8xf32>
    %32 = arith.addf %26, %31 : vector<8x8xf32>
    %33 = vector.broadcast %10 : vector<8x1xf32> to vector<8x8xf32>
    %34 = arith.subf %33, %16 : vector<8x8xf32>
    %cst_21 = arith.constant 0.000000e+00 : f32
    %35 = vector.broadcast %cst_21 : f32 to vector<8x8xf32>
    %36 = arith.subf %35, %34 : vector<8x8xf32>
    %cst_22 = arith.constant 0.000000e+00 : f32
    %37 = vector.broadcast %cst_22 : f32 to vector<8x8xf32>
    %38 = arith.maximumf %36, %37 : vector<8x8xf32>
    %39 = math.absf %36 : vector<8x8xf32>
    %cst_23 = arith.constant 0.000000e+00 : f32
    %40 = vector.broadcast %cst_23 : f32 to vector<8x8xf32>
    %41 = arith.subf %40, %39 : vector<8x8xf32>
    %42 = math.exp %41 : vector<8x8xf32>
    %43 = math.log1p %42 : vector<8x8xf32>
    %44 = arith.addf %38, %43 : vector<8x8xf32>
    %45 = arith.addf %32, %44 : vector<8x8xf32>
    %46 = vector.shape_cast %45 : vector<8x8xf32> to vector<1x8x8xf32>
    %cst_24 = arith.constant dense<0.000000e+00> : vector<1xf32>
    %47 = vector.multi_reduction <add>, %46, %cst_24 [1, 2] : vector<1x8x8xf32> to vector<1xf32>
    %48 = vector.shape_cast %47 : vector<1xf32> to vector<1x1x1xf32>
    %49 = vector.extract %48[0, 0, 0] : f32 from vector<1x1x1xf32>
    %50 = vector.broadcast %49 : f32 to vector<1x8x128xf32>
    %c0_25 = arith.constant 0 : index
    %c0_26 = arith.constant 0 : index
    %c0_27 = arith.constant 0 : index
    %51 = vector.load %arg7[%c0_25, %c0_26, %c0_27] : memref<1x8x128xf32, #tpu.memory_space<vmem>>, vector<1x8x128xf32>
    tpu.vector_store %arg7[%c0_25, %c0_26, %c0_27], %50 {strides = array<i32>} : memref<1x8x128xf32, #tpu.memory_space<vmem>>, vector<1x8x128xf32>,
    return
  }
  func.func @transform_0(%arg0: i32) -> (i32, i32) {
    %c0_i32 = arith.constant 0 : i32
    %c0_i32_0 = arith.constant 0 : i32
    return %arg0, %c0_i32 : i32, i32
  }
  func.func @transform_1(%arg0: i32) -> (i32, i32) {
    %c0_i32 = arith.constant 0 : i32
    %c0_i32_0 = arith.constant 0 : i32
    return %arg0, %c0_i32 : i32, i32
  }
  func.func @transform_2(%arg0: i32) -> (i32, i32) {
    %c0_i32 = arith.constant 0 : i32
    %c0_i32_0 = arith.constant 0 : i32
    return %arg0, %c0_i32 : i32, i32
  }
  func.func @transform_3(%arg0: i32) -> (i32, i32) {
    %c0_i32 = arith.constant 0 : i32
    %c0_i32_0 = arith.constant 0 : i32
    return %arg0, %c0_i32 : i32, i32
  }
  func.func @transform_4(%arg0: i32) -> (i32, i32) {
    %c0_i32 = arith.constant 0 : i32
    %c0_i32_0 = arith.constant 0 : i32
    %c0_i32_1 = arith.constant 0 : i32
    return %c0_i32, %c0_i32_0 : i32, i32
  }
  func.func @transform_5(%arg0: i32) -> (i32, i32) {
    %c0_i32 = arith.constant 0 : i32
    %c0_i32_0 = arith.constant 0 : i32
    %c0_i32_1 = arith.constant 0 : i32
    return %c0_i32, %c0_i32_0 : i32, i32
  }
  func.func @transform_6(%arg0: i32) -> (i32, i32, i32) {
    %c0_i32 = arith.constant 0 : i32
    %c0_i32_0 = arith.constant 0 : i32
    %c0_i32_1 = arith.constant 0 : i32
    return %arg0, %c0_i32, %c0_i32_0 : i32, i32, i32
  }
}

</mosaic_0001>

<llo_original>
// kernel: tpu_custom_call.1
$region0: #{tpu_custom_call.1}
  #allocation0 [shape = 'u32[]', space=smem, size = 0x4, offset = 0x4, fixed_abs, tag = 'smem constant byte address 0x4 - core index']
  #allocation1 [shape = 'u32[72,128]{1,0:T(1,128)}', space=vmem, size = 0x9000, scoped, tag = 'internal scratch']
  %s0 = inlined_call_operand.vmem [shape: f32[16,32], index: 0, kind: input, shape index: {}]
  %s1 = inlined_call_operand.vmem [shape: f32[16,32], index: 1, kind: input, shape index: {}]
  %s2 = inlined_call_operand.vmem [shape: f32[16,256], index: 2, kind: input, shape index: {}]
  %s3 = inlined_call_operand.vmem [shape: f32[16,256], index: 3, kind: input, shape index: {}]
  %s4 = inlined_call_operand.vmem [shape: f32[32,256], index: 4, kind: input, shape index: {}]
  %s5 = inlined_call_operand.vmem [shape: f32[256,8], index: 5, kind: input, shape index: {}]
  %s6 = inlined_call_operand.hbm [shape: f32[2,8,128], index: 6, kind: output, shape index: {}]
  %s7 = sld [smem:[#allocation0]]
  $region57: #{tpu_custom_call.1} parent=0
    _
  %s9 = ssub.s32 1, %s7
  %s10 = scalar_select 0, %s9, %s7
  $region1: #{tpu_custom_call.1} parent=0
    #allocation2 [shape = 'u8[8192]{0}', space=vmem, size = 0x2000, scoped, tag = 'output window, operand 0']
    #allocation3 [shape = 's32[2]{0}', space=sflag, size = 0x8, scoped, tag = 'scoped memory for tpu_custom_call.1']
    %11 = vsyncpa [#allocation3], 0
    %s12 = scalar_lea.sflag [#allocation3], 1
    %13 = vsyncpa %s12, 0
    loop: start=0, step=1, limit=4
    $region2: #{tpu_custom_call.1} parent=1 // loop_pre_header
      _
    $region3: #{tpu_custom_call.1} parent=1 // loop_header
      %s15 = sphi 0, %s19
      %p16 = scmp.ge.s32.totalorder %s15, 4
      %s25 = sphi 0, %s27
      %s28 = sphi 0, %s25
      %s29 = sphi 0, %s28
      %s45 = sphi 0, %s29
      %s51 = sphi 0, %s53
      %s54 = sphi 0, %s51
      %s55 = sphi 0, %s54
      %s71 = sphi 0, %s55
      %s77 = sphi 0, %s79
      %s80 = sphi 0, %s77
      %s81 = sphi 0, %s80
      %s97 = sphi 0, %s81
      %s103 = sphi 0, %s105
      %s106 = sphi 0, %s103
      %s107 = sphi 0, %s106
      %s123 = sphi 0, %s107
      %s127 = sphi 0, %s127
      %s129 = sphi 0, %s127
      %s130 = sphi 0, %s129
      %s144 = sphi 0, %s130
      %s148 = sphi 0, %s148
      %s150 = sphi 0, %s148
      %s151 = sphi 0, %s150
      %s165 = sphi 0, %s151
      %s171 = sphi 0, %s173
      %s174 = sphi 0, %s171
      %s175 = sphi 0, %s174
      %s191 = sphi 0, %s175
    $region4: #{tpu_custom_call.1} parent=1 // loop_header_branch
      %18 = sbr.rel (%p16) target = $region8
    $region5: #{tpu_custom_call.1} parent=1 // loop_body
      %s20 = ssub.s32 %s15, 1
      %s21 = ssub.s32 %s15, 2
      %s22 = sadd.s32 %s15, 1
      %s23 = ssub.s32 %s15, %s22
      %p24 = scmp.eq.s32.totalorder %s23, 0
      %s26 = sadd.s32 %s25, 1
      %s27 = scalar_select %p24, %s25, %s26
      %p30 = pneg %p24
      %p31 = scmp.eq.s32.totalorder %s15, 1
      %p32 = por %p30, %p31
      %p33 = scmp.ne.s32.totalorder %s25, %s28
      %p34 = scmp.eq.s32.totalorder %s15, 0
      %p35 = por %p33, %p34
      %p36 = scmp.ne.s32.totalorder %s25, %s28
      %p37 = scmp.eq.s32.totalorder %s20, 1
      %p38 = por %p36, %p37
      %p39 = scmp.ne.s32.totalorder %s28, %s29
      %p40 = scmp.eq.s32.totalorder %s20, 0
      %p41 = por %p39, %p40
      %p42 = scmp.ne.s32.totalorder %s28, %s29
      %p43 = scmp.eq.s32.totalorder %s21, 1
      %p44 = por %p42, %p43
      %p46 = scmp.ne.s32.totalorder %s29, %s45
      %p47 = scmp.eq.s32.totalorder %s21, 0
      %p48 = por %p46, %p47
      %s49 = ssub.s32 %s15, %s22
      %p50 = scmp.eq.s32.totalorder %s49, 0
      %s52 = sadd.s32 %s51, 1
      %s53 = scalar_select %p50, %s51, %s52
      %p56 = pneg %p50
      %p57 = scmp.eq.s32.totalorder %s15, 1
      %p58 = por %p56, %p57
      %p59 = scmp.ne.s32.totalorder %s51, %s54
      %p60 = scmp.eq.s32.totalorder %s15, 0
      %p61 = por %p59, %p60
      %p62 = scmp.ne.s32.totalorder %s51, %s54
      %p63 = scmp.eq.s32.totalorder %s20, 1
      %p64 = por %p62, %p63
      %p65 = scmp.ne.s32.totalorder %s54, %s55
      %p66 = scmp.eq.s32.totalorder %s20, 0
      %p67 = por %p65, %p66
      %p68 = scmp.ne.s32.totalorder %s54, %s55
      %p69 = scmp.eq.s32.totalorder %s21, 1
      %p70 = por %p68, %p69
      %p72 = scmp.ne.s32.totalorder %s55, %s71
      %p73 = scmp.eq.s32.totalorder %s21, 0
      %p74 = por %p72, %p73
      %s75 = ssub.s32 %s15, %s22
      %p76 = scmp.eq.s32.totalorder %s75, 0
      %s78 = sadd.s32 %s77, 1
      %s79 = scalar_select %p76, %s77, %s78
      %p82 = pneg %p76
      %p83 = scmp.eq.s32.totalorder %s15, 1
      %p84 = por %p82, %p83
      %p85 = scmp.ne.s32.totalorder %s77, %s80
      %p86 = scmp.eq.s32.totalorder %s15, 0
      %p87 = por %p85, %p86
      %p88 = scmp.ne.s32.totalorder %s77, %s80
      %p89 = scmp.eq.s32.totalorder %s20, 1
      %p90 = por %p88, %p89
      %p91 = scmp.ne.s32.totalorder %s80, %s81
      %p92 = scmp.eq.s32.totalorder %s20, 0
      %p93 = por %p91, %p92
      %p94 = scmp.ne.s32.totalorder %s80, %s81
      %p95 = scmp.eq.s32.totalorder %s21, 1
      %p96 = por %p94, %p95
      %p98 = scmp.ne.s32.totalorder %s81, %s97
      %p99 = scmp.eq.s32.totalorder %s21, 0
      %p100 = por %p98, %p99
      %s101 = ssub.s32 %s15, %s22
      %p102 = scmp.eq.s32.totalorder %s101, 0
      %s104 = sadd.s32 %s103, 1
      %s105 = scalar_select %p102, %s103, %s104
      %p108 = pneg %p102
      %p109 = scmp.eq.s32.totalorder %s15, 1
      %p110 = por %p108, %p109
      %p111 = scmp.ne.s32.totalorder %s103, %s106
      %p112 = scmp.eq.s32.totalorder %s15, 0
      %p113 = por %p111, %p112
      %p114 = scmp.ne.s32.totalorder %s103, %s106
      %p115 = scmp.eq.s32.totalorder %s20, 1
      %p116 = por %p114, %p115
      %p117 = scmp.ne.s32.totalorder %s106, %s107
      %p118 = scmp.eq.s32.totalorder %s20, 0
      %p119 = por %p117, %p118
      %p120 = scmp.ne.s32.totalorder %s106, %s107
      %p121 = scmp.eq.s32.totalorder %s21, 1
      %p122 = por %p120, %p121
      %p124 = scmp.ne.s32.totalorder %s107, %s123
      %p125 = scmp.eq.s32.totalorder %s21, 0
      %p126 = por %p124, %p125
      %s128 = sadd.s32 %s127, 1
      %p131 = scmp.eq.s32.totalorder %s15, 1
      %p132 = scmp.ne.s32.totalorder %s127, %s129
      %p133 = scmp.eq.s32.totalorder %s15, 0
      %p134 = por %p132, %p133
      %p135 = scmp.ne.s32.totalorder %s127, %s129
      %p136 = scmp.eq.s32.totalorder %s20, 1
      %p137 = por %p135, %p136
      %p138 = scmp.ne.s32.totalorder %s129, %s130
      %p139 = scmp.eq.s32.totalorder %s20, 0
      %p140 = por %p138, %p139
      %p141 = scmp.ne.s32.totalorder %s129, %s130
      %p142 = scmp.eq.s32.totalorder %s21, 1
      %p143 = por %p141, %p142
      %p145 = scmp.ne.s32.totalorder %s130, %s144
      %p146 = scmp.eq.s32.totalorder %s21, 0
      %p147 = por %p145, %p146
      %s149 = sadd.s32 %s148, 1
      %p152 = scmp.eq.s32.totalorder %s15, 1
      %p153 = scmp.ne.s32.totalorder %s148, %s150
      %p154 = scmp.eq.s32.totalorder %s15, 0
      %p155 = por %p153, %p154
      %p156 = scmp.ne.s32.totalorder %s148, %s150
      %p157 = scmp.eq.s32.totalorder %s20, 1
      %p158 = por %p156, %p157
      %p159 = scmp.ne.s32.totalorder %s150, %s151
      %p160 = scmp.eq.s32.totalorder %s20, 0
      %p161 = por %p159, %p160
      %p162 = scmp.ne.s32.totalorder %s150, %s151
      %p163 = scmp.eq.s32.totalorder %s21, 1
      %p164 = por %p162, %p163
      %p166 = scmp.ne.s32.totalorder %s151, %s165
      %p167 = scmp.eq.s32.totalorder %s21, 0
      %p168 = por %p166, %p167
      %s169 = ssub.s32 %s15, %s22
      %p170 = scmp.eq.s32.totalorder %s169, 0
      %s172 = sadd.s32 %s171, 1
      %s173 = scalar_select %p170, %s171, %s172
      %p176 = pneg %p170
      %p177 = scmp.eq.s32.totalorder %s15, 1
      %p178 = por %p176, %p177
      %p179 = scmp.ne.s32.totalorder %s171, %s174
      %p180 = scmp.eq.s32.totalorder %s15, 0
      %p181 = por %p179, %p180
      %p182 = scmp.ne.s32.totalorder %s171, %s174
      %p183 = scmp.eq.s32.totalorder %s20, 1
      %p184 = por %p182, %p183
      %p185 = scmp.ne.s32.totalorder %s174, %s175
      %p186 = scmp.eq.s32.totalorder %s20, 0
      %p187 = por %p185, %p186
      %p188 = scmp.ne.s32.totalorder %s174, %s175
      %p189 = scmp.eq.s32.totalorder %s21, 1
      %p190 = por %p188, %p189
      %p192 = scmp.ne.s32.totalorder %s175, %s191
      %p193 = scmp.eq.s32.totalorder %s21, 0
      %p194 = por %p192, %p193
      %p195 = scmp.le.s32.totalorder 1, %s15
      %p196 = scmp.lt.s32.totalorder %s15, 3
      %p197 = pnand %p195, %p196
      %p198 = pneg %p197
      // Predicated region
      $region9: #{tpu_custom_call.1} parent=5 // pred_check
        _
      $region10: #{tpu_custom_call.1} parent=5 // pred_check_branch
        %200 = sbr.rel (%p197) target = $region12
      $region11: #{tpu_custom_call.1} parent=5 // pred_region
        %s201 = ssub.s32 %s15, 1
        // Predicated region
        $region13: #{tpu_custom_call.1} parent=11 // pred_check
          %p202 = pneg %p140
        $region14: #{tpu_custom_call.1} parent=11 // pred_check_branch
          %204 = sbr.rel (%p202) target = $region16
        $region15: #{tpu_custom_call.1} parent=11 // pred_region
          _
        $region16: #{tpu_custom_call.1} parent=11 // pred_fallthru
          _
        // Predicated region
        $region17: #{tpu_custom_call.1} parent=11 // pred_check
          %p205 = pneg %p161
        $region18: #{tpu_custom_call.1} parent=11 // pred_check_branch
          %207 = sbr.rel (%p205) target = $region20
        $region19: #{tpu_custom_call.1} parent=11 // pred_region
          _
        $region20: #{tpu_custom_call.1} parent=11 // pred_fallthru
          _
      $region12: #{tpu_custom_call.1} parent=5 // pred_fallthru
        _
      %p208 = scmp.lt.s32.totalorder %s15, 2
      // Predicated region
      $region21: #{tpu_custom_call.1} parent=5 // pred_check
        %p209 = pneg %p208
      $region22: #{tpu_custom_call.1} parent=5 // pred_check_branch
        %211 = sbr.rel (%p209) target = $region24
      $region23: #{tpu_custom_call.1} parent=5 // pred_region
        // Predicated region
        $region25: #{tpu_custom_call.1} parent=23 // pred_check
          %p212 = pneg %p35
        $region26: #{tpu_custom_call.1} parent=23 // pred_check_branch
          %214 = sbr.rel (%p212) target = $region28
        $region27: #{tpu_custom_call.1} parent=23 // pred_region
          %p215 = scmp.lt.s32.totalorder %s15, 1
          %s216 = scalar_select %p215, %s15, 1
          %s217 = smul.addr %s216, 8
          %s218 = scalar_lea.vmem %s0, %s217
        $region28: #{tpu_custom_call.1} parent=23 // pred_fallthru
          _
        // Predicated region
        $region29: #{tpu_custom_call.1} parent=23 // pred_check
          %p219 = pneg %p61
        $region30: #{tpu_custom_call.1} parent=23 // pred_check_branch
          %221 = sbr.rel (%p219) target = $region32
        $region31: #{tpu_custom_call.1} parent=23 // pred_region
          %p222 = scmp.lt.s32.totalorder %s15, 1
          %s223 = scalar_select %p222, %s15, 1
          %s224 = smul.addr %s223, 8
          %s225 = scalar_lea.vmem %s1, %s224
        $region32: #{tpu_custom_call.1} parent=23 // pred_fallthru
          _
        // Predicated region
        $region33: #{tpu_custom_call.1} parent=23 // pred_check
          %p226 = pneg %p87
        $region34: #{tpu_custom_call.1} parent=23 // pred_check_branch
          %228 = sbr.rel (%p226) target = $region36
        $region35: #{tpu_custom_call.1} parent=23 // pred_region
          %p229 = scmp.lt.s32.totalorder %s15, 1
          %s230 = scalar_select %p229, %s15, 1
          %s231 = smul.addr %s230, 2
          %s232 = smul.addr %s231, 8
          %s233 = scalar_lea.vmem %s2, %s232
        $region36: #{tpu_custom_call.1} parent=23 // pred_fallthru
          _
        // Predicated region
        $region37: #{tpu_custom_call.1} parent=23 // pred_check
          %p234 = pneg %p113
        $region38: #{tpu_custom_call.1} parent=23 // pred_check_branch
          %236 = sbr.rel (%p234) target = $region40
        $region39: #{tpu_custom_call.1} parent=23 // pred_region
          %p237 = scmp.lt.s32.totalorder %s15, 1
          %s238 = scalar_select %p237, %s15, 1
          %s239 = smul.addr %s238, 2
          %s240 = smul.addr %s239, 8
          %s241 = scalar_lea.vmem %s3, %s240
        $region40: #{tpu_custom_call.1} parent=23 // pred_fallthru
          _
      $region24: #{tpu_custom_call.1} parent=5 // pred_fallthru
        _
      %p242 = scmp.le.s32.totalorder 1, %s15
      %p243 = scmp.lt.s32.totalorder %s15, 3
      %p244 = pnand %p242, %p243
      %p245 = pneg %p244
      // Predicated region
      $region41: #{tpu_custom_call.1} parent=5 // pred_check
        _
      $region42: #{tpu_custom_call.1} parent=5 // pred_check_branch
        %247 = sbr.rel (%p244) target = $region44
      $region43: #{tpu_custom_call.1} parent=5 // pred_region
        %s248 = ssub.s32 %s15, 1
        %p249 = scmp.lt.s32.totalorder %s20, 1
        %s250 = scalar_select %p249, %s20, 1
        %s251 = smul.addr %s250, 8
        %s252 = scalar_lea.vmem %s0, %s251
        %p253 = pneg %p41
        %p254 = pneg %p38
        %p255 = scmp.lt.s32.totalorder %s20, 1
        %s256 = scalar_select %p255, %s20, 1
        %s257 = smul.addr %s256, 8
        %s258 = scalar_lea.vmem %s1, %s257
        %p259 = pneg %p67
        %p260 = pneg %p64
        %p261 = scmp.lt.s32.totalorder %s20, 1
        %s262 = scalar_select %p261, %s20, 1
        %s263 = smul.addr %s262, 2
        %s264 = smul.addr %s263, 8
        %s265 = scalar_lea.vmem %s2, %s264
        %p266 = pneg %p93
        %p267 = pneg %p90
        %p268 = scmp.lt.s32.totalorder %s20, 1
        %s269 = scalar_select %p268, %s20, 1
        %s270 = smul.addr %s269, 2
        %s271 = smul.addr %s270, 8
        %s272 = scalar_lea.vmem %s3, %s271
        %p273 = pneg %p119
        %p274 = pneg %p116
        %p275 = pneg %p140
        %p276 = pneg %p137
        %p277 = pneg %p161
        %p278 = pneg %p158
        %p279 = pneg %p187
        %p280 = pneg %p184
        %s281 = sand.u32 %s174, 1
        %s282 = scalar_lea.sflag [#allocation3], %s281
        %s283 = sand.u32 %s174, 1
        %s284 = smul.addr %s283, 8
        %s285 = scalar_lea.vmem [#allocation2], %s284
        %p286 = scmp.lt.s32.totalorder %s20, 1
        %s287 = scalar_select %p286, %s20, 1
        %s288 = smul.addr %s287, 8
        %s289 = scalar_lea.vmem %s0, %s288
        %p290 = scmp.lt.s32.totalorder %s20, 1
        %s291 = scalar_select %p290, %s20, 1
        %s292 = smul.addr %s291, 8
        %s293 = scalar_lea.vmem %s1, %s292
        %p294 = scmp.lt.s32.totalorder %s20, 1
        %s295 = scalar_select %p294, %s20, 1
        %s296 = smul.addr %s295, 2
        %s297 = smul.addr %s296, 8
        %s298 = scalar_lea.vmem %s2, %s297
        %p299 = scmp.lt.s32.totalorder %s20, 1
        %s300 = scalar_select %p299, %s20, 1
        %s301 = smul.addr %s300, 2
        %s302 = smul.addr %s301, 8
        %s303 = scalar_lea.vmem %s3, %s302
        %v304 = vld [vmem:[%s289] sm:$0xff]
        %v305 = vld [vmem:[%s293] sm:$0xff]
        %v306 = vld [vmem:[%s4] sm:$0xff]
        %v307 = vld [vmem:[%s4 + $0x8] sm:$0xff]
        %v308 = vld [vmem:[%s4 + $0x10] sm:$0xff]
        %v309 = vld [vmem:[%s4 + $0x18] sm:$0xff]
        %v310 = vld [vmem:[%s4 + $0x20] sm:$0xff]
        %v311 = vld [vmem:[%s4 + $0x28] sm:$0xff]
        %v312 = vld [vmem:[%s4 + $0x30] sm:$0xff]
        %v313 = vld [vmem:[%s4 + $0x38] sm:$0xff]
        %v314 = vld [vmem:[%s5] sm:$0xff]
        %v315 = vld [vmem:[%s5 + $0x8] sm:$0xff]
        %v316 = vld [vmem:[%s5 + $0x10] sm:$0xff]
        %v317 = vld [vmem:[%s5 + $0x18] sm:$0xff]
        %v318 = vld [vmem:[%s5 + $0x20] sm:$0xff]
        %v319 = vld [vmem:[%s5 + $0x28] sm:$0xff]
        %v320 = vld [vmem:[%s5 + $0x30] sm:$0xff]
        %v321 = vld [vmem:[%s5 + $0x38] sm:$0xff]
        %v322 = vld [vmem:[%s5 + $0x40] sm:$0xff]
        %v323 = vld [vmem:[%s5 + $0x48] sm:$0xff]
        %v324 = vld [vmem:[%s5 + $0x50] sm:$0xff]
        %v325 = vld [vmem:[%s5 + $0x58] sm:$0xff]
        %v326 = vld [vmem:[%s5 + $0x60] sm:$0xff]
        %v327 = vld [vmem:[%s5 + $0x68] sm:$0xff]
        %v328 = vld [vmem:[%s5 + $0x70] sm:$0xff]
        %v329 = vld [vmem:[%s5 + $0x78] sm:$0xff]
        %v330 = vld [vmem:[%s5 + $0x80] sm:$0xff]
        %v331 = vld [vmem:[%s5 + $0x88] sm:$0xff]
        %v332 = vld [vmem:[%s5 + $0x90] sm:$0xff]
        %v333 = vld [vmem:[%s5 + $0x98] sm:$0xff]
        %v334 = vld [vmem:[%s5 + $0xa0] sm:$0xff]
        %v335 = vld [vmem:[%s5 + $0xa8] sm:$0xff]
        %v336 = vld [vmem:[%s5 + $0xb0] sm:$0xff]
        %v337 = vld [vmem:[%s5 + $0xb8] sm:$0xff]
        %v338 = vld [vmem:[%s5 + $0xc0] sm:$0xff]
        %v339 = vld [vmem:[%s5 + $0xc8] sm:$0xff]
        %v340 = vld [vmem:[%s5 + $0xd0] sm:$0xff]
        %v341 = vld [vmem:[%s5 + $0xd8] sm:$0xff]
        %v342 = vld [vmem:[%s5 + $0xe0] sm:$0xff]
        %v343 = vld [vmem:[%s5 + $0xe8] sm:$0xff]
        %v344 = vld [vmem:[%s5 + $0xf0] sm:$0xff]
        %v345 = vld [vmem:[%s5 + $0xf8] sm:$0xff]
        %v346 = vld [vmem:[%s298] sm:$0xff]
        %v347 = vld [vmem:[%s298 + $0x8] sm:$0xff]
        %v348 = vld [vmem:[%s303] sm:$0xff]
        %v349 = vld [vmem:[%s303 + $0x8] sm:$0xff]
        %v350 = vmul.f32 %v304, %v305
        %vm351 = vcmask 261120
        %v352 = vsel %vm351, %v350, 0.0
        %353 = vadd.xlane.f32.xlu0 %v352
        %v354 = vpop.xlane.xlu0 %353
        %v356 = vsel %vm351, %v305, 0
        %358 = vmatpush.msra.mxu0 0.0
        %359 = vmatpush.msra.mxu0 0.0
        %360 = vmatpush.msra.mxu0 0.0
        %361 = vmatpush.msra.mxu0 0.0
        %362 = vmatpush.msra.mxu0 0.0
        %363 = vmatpush.msra.mxu0 0.0
        %364 = vmatpush.msra.mxu0 0.0
        %365 = vmatpush.msra.mxu0 0.0
        %366 = vmatpush.msra.mxu0 0.0
        %367 = vmatpush.msra.mxu0 0.0
        %368 = vmatpush.msra.mxu0 0.0
        %369 = vmatpush.msra.mxu0 0.0
        %v370 = vand.u32 %v312, 4294901760
        %371 = vmatpush.msra.mxu0 %v370
        %v372 = vand.u32 %v310, 4294901760
        %373 = vmatpush.msra.mxu0 %v372
        %v374 = vand.u32 %v308, 4294901760
        %375 = vmatpush.msra.mxu0 %v374
        %v376 = vand.u32 %v306, 4294901760
        %377 = vmatpush.msra.mxu0 %v376
        %v378 = vand.u32 %v356, 4294901760
        %v379 = vsub.f32 %v356, %v378
        %v380 = vand.u32 %v379, 4294901760
        %v381 = vsub.f32 %v379, %v380
        %v382 = vand.u32 %v381, 4294901760
        %383 = vmatmul.f32.gmra.mxu0 %v382
        %v384 = vpop.f32.mrf.mxu0
        %v385 = vadd.f32 0.0, %v384
        %386 = vdwg.mxu0
        %387 = vmatpush.msra.mxu0 0.0
        %388 = vmatpush.msra.mxu0 0.0
        %389 = vmatpush.msra.mxu0 0.0
        %390 = vmatpush.msra.mxu0 0.0
        %391 = vmatpush.msra.mxu0 0.0
        %392 = vmatpush.msra.mxu0 0.0
        %393 = vmatpush.msra.mxu0 0.0
        %394 = vmatpush.msra.mxu0 0.0
        %395 = vmatpush.msra.mxu0 0.0
        %396 = vmatpush.msra.mxu0 0.0
        %397 = vmatpush.msra.mxu0 0.0
        %398 = vmatpush.msra.mxu0 0.0
        %v399 = vand.u32 %v312, 4294901760
        %v400 = vsub.f32 %v312, %v399
        %v401 = vand.u32 %v400, 4294901760
        %v402 = vsub.f32 %v400, %v401
        %v403 = vand.u32 %v402, 4294901760
        %404 = vmatpush.msra.mxu0 %v403
        %v405 = vand.u32 %v310, 4294901760
        %v406 = vsub.f32 %v310, %v405
        %v407 = vand.u32 %v406, 4294901760
        %v408 = vsub.f32 %v406, %v407
        %v409 = vand.u32 %v408, 4294901760
        %410 = vmatpush.msra.mxu0 %v409
        %v411 = vand.u32 %v308, 4294901760
        %v412 = vsub.f32 %v308, %v411
        %v413 = vand.u32 %v412, 4294901760
        %v414 = vsub.f32 %v412, %v413
        %v415 = vand.u32 %v414, 4294901760
        %416 = vmatpush.msra.mxu0 %v415
        %v417 = vand.u32 %v306, 4294901760
        %v418 = vsub.f32 %v306, %v417
        %v419 = vand.u32 %v418, 4294901760
        %v420 = vsub.f32 %v418, %v419
        %v421 = vand.u32 %v420, 4294901760
        %422 = vmatpush.msra.mxu0 %v421
        %v423 = vand.u32 %v356, 4294901760
        %424 = vmatmul.f32.gmra.mxu0 %v423
        %v425 = vpop.f32.mrf.mxu0
        %v426 = vadd.f32 %v385, %v425
        %427 = vdwg.mxu0
        %428 = vmatpush.msra.mxu0 0.0
        %429 = vmatpush.msra.mxu0 0.0
        %430 = vmatpush.msra.mxu0 0.0
        %431 = vmatpush.msra.mxu0 0.0
        %432 = vmatpush.msra.mxu0 0.0
        %433 = vmatpush.msra.mxu0 0.0
        %434 = vmatpush.msra.mxu0 0.0
        %435 = vmatpush.msra.mxu0 0.0
        %436 = vmatpush.msra.mxu0 0.0
        %437 = vmatpush.msra.mxu0 0.0
        %438 = vmatpush.msra.mxu0 0.0
        %439 = vmatpush.msra.mxu0 0.0
        %v440 = vand.u32 %v312, 4294901760
        %v441 = vsub.f32 %v312, %v440
        %442 = vmatpush.msra.mxu0 %v441
        %v443 = vand.u32 %v310, 4294901760
        %v444 = vsub.f32 %v310, %v443
        %445 = vmatpush.msra.mxu0 %v444
        %v446 = vand.u32 %v308, 4294901760
        %v447 = vsub.f32 %v308, %v446
        %448 = vmatpush.msra.mxu0 %v447
        %v449 = vand.u32 %v306, 4294901760
        %v450 = vsub.f32 %v306, %v449
        %451 = vmatpush.msra.mxu0 %v450
        %v452 = vand.u32 %v356, 4294901760
        %v453 = vsub.f32 %v356, %v452
        %454 = vmatmul.f32.gmra.mxu0 %v453
        %v455 = vpop.f32.mrf.mxu0
        %v456 = vadd.f32 %v426, %v455
        %457 = vdwg.mxu0
        %458 = vmatpush.msra.mxu0 0.0
        %459 = vmatpush.msra.mxu0 0.0
        %460 = vmatpush.msra.mxu0 0.0
        %461 = vmatpush.msra.mxu0 0.0
        %462 = vmatpush.msra.mxu0 0.0
        %463 = vmatpush.msra.mxu0 0.0
        %464 = vmatpush.msra.mxu0 0.0
        %465 = vmatpush.msra.mxu0 0.0
        %466 = vmatpush.msra.mxu0 0.0
        %467 = vmatpush.msra.mxu0 0.0
        %468 = vmatpush.msra.mxu0 0.0
        %469 = vmatpush.msra.mxu0 0.0
        %v470 = vand.u32 %v312, 4294901760
        %471 = vmatpush.msra.mxu0 %v470
        %v472 = vand.u32 %v310, 4294901760
        %473 = vmatpush.msra.mxu0 %v472
        %v474 = vand.u32 %v308, 4294901760
        %475 = vmatpush.msra.mxu0 %v474
        %v476 = vand.u32 %v306, 4294901760
        %477 = vmatpush.msra.mxu0 %v476
        %v478 = vand.u32 %v356, 4294901760
        %v479 = vsub.f32 %v356, %v478
        %v480 = vand.u32 %v479, 4294901760
        %481 = vmatmul.f32.gmra.mxu0 %v480
        %v482 = vpop.f32.mrf.mxu0
        %v483 = vadd.f32 %v456, %v482
        %484 = vdwg.mxu0
        %485 = vmatpush.msra.mxu0 0.0
        %486 = vmatpush.msra.mxu0 0.0
        %487 = vmatpush.msra.mxu0 0.0
        %488 = vmatpush.msra.mxu0 0.0
        %489 = vmatpush.msra.mxu0 0.0
        %490 = vmatpush.msra.mxu0 0.0
        %491 = vmatpush.msra.mxu0 0.0
        %492 = vmatpush.msra.mxu0 0.0
        %493 = vmatpush.msra.mxu0 0.0
        %494 = vmatpush.msra.mxu0 0.0
        %495 = vmatpush.msra.mxu0 0.0
        %496 = vmatpush.msra.mxu0 0.0
        %v497 = vand.u32 %v312, 4294901760
        %v498 = vsub.f32 %v312, %v497
        %v499 = vand.u32 %v498, 4294901760
        %500 = vmatpush.msra.mxu0 %v499
        %v501 = vand.u32 %v310, 4294901760
        %v502 = vsub.f32 %v310, %v501
        %v503 = vand.u32 %v502, 4294901760
        %504 = vmatpush.msra.mxu0 %v503
        %v505 = vand.u32 %v308, 4294901760
        %v506 = vsub.f32 %v308, %v505
        %v507 = vand.u32 %v506, 4294901760
        %508 = vmatpush.msra.mxu0 %v507
        %v509 = vand.u32 %v306, 4294901760
        %v510 = vsub.f32 %v306, %v509
        %v511 = vand.u32 %v510, 4294901760
        %512 = vmatpush.msra.mxu0 %v511
        %v513 = vand.u32 %v356, 4294901760
        %514 = vmatmul.f32.gmra.mxu0 %v513
        %v515 = vpop.f32.mrf.mxu0
        %v516 = vadd.f32 %v483, %v515
        %517 = vdwg.mxu0
        %518 = vmatpush.msra.mxu0 0.0
        %519 = vmatpush.msra.mxu0 0.0
        %520 = vmatpush.msra.mxu0 0.0
        %521 = vmatpush.msra.mxu0 0.0
        %522 = vmatpush.msra.mxu0 0.0
        %523 = vmatpush.msra.mxu0 0.0
        %524 = vmatpush.msra.mxu0 0.0
        %525 = vmatpush.msra.mxu0 0.0
        %526 = vmatpush.msra.mxu0 0.0
        %527 = vmatpush.msra.mxu0 0.0
        %528 = vmatpush.msra.mxu0 0.0
        %529 = vmatpush.msra.mxu0 0.0
        %v530 = vand.u32 %v312, 4294901760
        %531 = vmatpush.msra.mxu0 %v530
        %v532 = vand.u32 %v310, 4294901760
        %533 = vmatpush.msra.mxu0 %v532
        %v534 = vand.u32 %v308, 4294901760
        %535 = vmatpush.msra.mxu0 %v534
        %v536 = vand.u32 %v306, 4294901760
        %537 = vmatpush.msra.mxu0 %v536
        %v538 = vand.u32 %v356, 4294901760
        %539 = vmatmul.f32.gmra.mxu0 %v538
        %v540 = vpop.f32.mrf.mxu0
        %v541 = vadd.f32 %v516, %v540
        %542 = vdwg.mxu0
        %543 = vmatpush.msra.mxu0 0.0
        %544 = vmatpush.msra.mxu0 0.0
        %545 = vmatpush.msra.mxu0 0.0
        %546 = vmatpush.msra.mxu0 0.0
        %547 = vmatpush.msra.mxu0 0.0
        %548 = vmatpush.msra.mxu0 0.0
        %549 = vmatpush.msra.mxu0 0.0
        %550 = vmatpush.msra.mxu0 0.0
        %551 = vmatpush.msra.mxu0 0.0
        %552 = vmatpush.msra.mxu0 0.0
        %553 = vmatpush.msra.mxu0 0.0
        %554 = vmatpush.msra.mxu0 0.0
        %v555 = vand.u32 %v313, 4294901760
        %556 = vmatpush.msra.mxu0 %v555
        %v557 = vand.u32 %v311, 4294901760
        %558 = vmatpush.msra.mxu0 %v557
        %v559 = vand.u32 %v309, 4294901760
        %560 = vmatpush.msra.mxu0 %v559
        %v561 = vand.u32 %v307, 4294901760
        %562 = vmatpush.msra.mxu0 %v561
        %v563 = vand.u32 %v356, 4294901760
        %v564 = vsub.f32 %v356, %v563
        %v565 = vand.u32 %v564, 4294901760
        %v566 = vsub.f32 %v564, %v565
        %v567 = vand.u32 %v566, 4294901760
        %568 = vmatmul.f32.gmra.mxu0 %v567
        %v569 = vpop.f32.mrf.mxu0
        %v570 = vadd.f32 0.0, %v569
        %571 = vdwg.mxu0
        %572 = vmatpush.msra.mxu0 0.0
        %573 = vmatpush.msra.mxu0 0.0
        %574 = vmatpush.msra.mxu0 0.0
        %575 = vmatpush.msra.mxu0 0.0
        %576 = vmatpush.msra.mxu0 0.0
        %577 = vmatpush.msra.mxu0 0.0
        %578 = vmatpush.msra.mxu0 0.0
        %579 = vmatpush.msra.mxu0 0.0
        %580 = vmatpush.msra.mxu0 0.0
        %581 = vmatpush.msra.mxu0 0.0
        %582 = vmatpush.msra.mxu0 0.0
        %583 = vmatpush.msra.mxu0 0.0
        %v584 = vand.u32 %v313, 4294901760
        %v585 = vsub.f32 %v313, %v584
        %v586 = vand.u32 %v585, 4294901760
        %v587 = vsub.f32 %v585, %v586
        %v588 = vand.u32 %v587, 4294901760
        %589 = vmatpush.msra.mxu0 %v588
        %v590 = vand.u32 %v311, 4294901760
        %v591 = vsub.f32 %v311, %v590
        %v592 = vand.u32 %v591, 4294901760
        %v593 = vsub.f32 %v591, %v592
        %v594 = vand.u32 %v593, 4294901760
        %595 = vmatpush.msra.mxu0 %v594
        %v596 = vand.u32 %v309, 4294901760
        %v597 = vsub.f32 %v309, %v596
        %v598 = vand.u32 %v597, 4294901760
        %v599 = vsub.f32 %v597, %v598
        %v600 = vand.u32 %v599, 4294901760
        %601 = vmatpush.msra.mxu0 %v600
        %v602 = vand.u32 %v307, 4294901760
        %v603 = vsub.f32 %v307, %v602
        %v604 = vand.u32 %v603, 4294901760
        %v605 = vsub.f32 %v603, %v604
        %v606 = vand.u32 %v605, 4294901760
        %607 = vmatpush.msra.mxu0 %v606
        %v608 = vand.u32 %v356, 4294901760
        %609 = vmatmul.f32.gmra.mxu0 %v608
        %v610 = vpop.f32.mrf.mxu0
        %v611 = vadd.f32 %v570, %v610
        %612 = vdwg.mxu0
        %613 = vmatpush.msra.mxu0 0.0
        %614 = vmatpush.msra.mxu0 0.0
        %615 = vmatpush.msra.mxu0 0.0
        %616 = vmatpush.msra.mxu0 0.0
        %617 = vmatpush.msra.mxu0 0.0
        %618 = vmatpush.msra.mxu0 0.0
        %619 = vmatpush.msra.mxu0 0.0
        %620 = vmatpush.msra.mxu0 0.0
        %621 = vmatpush.msra.mxu0 0.0
        %622 = vmatpush.msra.mxu0 0.0
        %623 = vmatpush.msra.mxu0 0.0
        %624 = vmatpush.msra.mxu0 0.0
        %v625 = vand.u32 %v313, 4294901760
        %v626 = vsub.f32 %v313, %v625
        %627 = vmatpush.msra.mxu0 %v626
        %v628 = vand.u32 %v311, 4294901760
        %v629 = vsub.f32 %v311, %v628
        %630 = vmatpush.msra.mxu0 %v629
        %v631 = vand.u32 %v309, 4294901760
        %v632 = vsub.f32 %v309, %v631
        %633 = vmatpush.msra.mxu0 %v632
        %v634 = vand.u32 %v307, 4294901760
        %v635 = vsub.f32 %v307, %v634
        %636 = vmatpush.msra.mxu0 %v635
        %v637 = vand.u32 %v356, 4294901760
        %v638 = vsub.f32 %v356, %v637
        %639 = vmatmul.f32.gmra.mxu0 %v638
        %v640 = vpop.f32.mrf.mxu0
        %v641 = vadd.f32 %v611, %v640
        %642 = vdwg.mxu0
        %643 = vmatpush.msra.mxu0 0.0
        %644 = vmatpush.msra.mxu0 0.0
        %645 = vmatpush.msra.mxu0 0.0
        %646 = vmatpush.msra.mxu0 0.0
        %647 = vmatpush.msra.mxu0 0.0
        %648 = vmatpush.msra.mxu0 0.0
        %649 = vmatpush.msra.mxu0 0.0
        %650 = vmatpush.msra.mxu0 0.0
        %651 = vmatpush.msra.mxu0 0.0
        %652 = vmatpush.msra.mxu0 0.0
        %653 = vmatpush.msra.mxu0 0.0
        %654 = vmatpush.msra.mxu0 0.0
        %v655 = vand.u32 %v313, 4294901760
        %656 = vmatpush.msra.mxu0 %v655
        %v657 = vand.u32 %v311, 4294901760
        %658 = vmatpush.msra.mxu0 %v657
        %v659 = vand.u32 %v309, 4294901760
        %660 = vmatpush.msra.mxu0 %v659
        %v661 = vand.u32 %v307, 4294901760
        %662 = vmatpush.msra.mxu0 %v661
        %v663 = vand.u32 %v356, 4294901760
        %v664 = vsub.f32 %v356, %v663
        %v665 = vand.u32 %v664, 4294901760
        %666 = vmatmul.f32.gmra.mxu0 %v665
        %v667 = vpop.f32.mrf.mxu0
        %v668 = vadd.f32 %v641, %v667
        %669 = vdwg.mxu0
        %670 = vmatpush.msra.mxu0 0.0
        %671 = vmatpush.msra.mxu0 0.0
        %672 = vmatpush.msra.mxu0 0.0
        %673 = vmatpush.msra.mxu0 0.0
        %674 = vmatpush.msra.mxu0 0.0
        %675 = vmatpush.msra.mxu0 0.0
        %676 = vmatpush.msra.mxu0 0.0
        %677 = vmatpush.msra.mxu0 0.0
        %678 = vmatpush.msra.mxu0 0.0
        %679 = vmatpush.msra.mxu0 0.0
        %680 = vmatpush.msra.mxu0 0.0
        %681 = vmatpush.msra.mxu0 0.0
        %v682 = vand.u32 %v313, 4294901760
        %v683 = vsub.f32 %v313, %v682
        %v684 = vand.u32 %v683, 4294901760
        %685 = vmatpush.msra.mxu0 %v684
        %v686 = vand.u32 %v311, 4294901760
        %v687 = vsub.f32 %v311, %v686
        %v688 = vand.u32 %v687, 4294901760
        %689 = vmatpush.msra.mxu0 %v688
        %v690 = vand.u32 %v309, 4294901760
        %v691 = vsub.f32 %v309, %v690
        %v692 = vand.u32 %v691, 4294901760
        %693 = vmatpush.msra.mxu0 %v692
        %v694 = vand.u32 %v307, 4294901760
        %v695 = vsub.f32 %v307, %v694
        %v696 = vand.u32 %v695, 4294901760
        %697 = vmatpush.msra.mxu0 %v696
        %v698 = vand.u32 %v356, 4294901760
        %699 = vmatmul.f32.gmra.mxu0 %v698
        %v700 = vpop.f32.mrf.mxu0
        %v701 = vadd.f32 %v668, %v700
        %702 = vdwg.mxu0
        %703 = vmatpush.msra.mxu0 0.0
        %704 = vmatpush.msra.mxu0 0.0
        %705 = vmatpush.msra.mxu0 0.0
        %706 = vmatpush.msra.mxu0 0.0
        %707 = vmatpush.msra.mxu0 0.0
        %708 = vmatpush.msra.mxu0 0.0
        %709 = vmatpush.msra.mxu0 0.0
        %710 = vmatpush.msra.mxu0 0.0
        %711 = vmatpush.msra.mxu0 0.0
        %712 = vmatpush.msra.mxu0 0.0
        %713 = vmatpush.msra.mxu0 0.0
        %714 = vmatpush.msra.mxu0 0.0
        %v715 = vand.u32 %v313, 4294901760
        %716 = vmatpush.msra.mxu0 %v715
        %v717 = vand.u32 %v311, 4294901760
        %718 = vmatpush.msra.mxu0 %v717
        %v719 = vand.u32 %v309, 4294901760
        %720 = vmatpush.msra.mxu0 %v719
        %v721 = vand.u32 %v307, 4294901760
        %722 = vmatpush.msra.mxu0 %v721
        %v723 = vand.u32 %v356, 4294901760
        %724 = vmatmul.f32.gmra.mxu0 %v723
        %v725 = vpop.f32.mrf.mxu0
        %v726 = vadd.f32 %v701, %v725
        %727 = vdwg.mxu0
        %v729 = vsel %vm351, %v304, 0
        %731 = vmatpush.msra.mxu0 0.0
        %732 = vmatpush.msra.mxu0 0.0
        %733 = vmatpush.msra.mxu0 0.0
        %734 = vmatpush.msra.mxu0 0.0
        %735 = vmatpush.msra.mxu0 0.0
        %736 = vmatpush.msra.mxu0 0.0
        %737 = vmatpush.msra.mxu0 0.0
        %738 = vmatpush.msra.mxu0 0.0
        %739 = vmatpush.msra.mxu0 0.0
        %740 = vmatpush.msra.mxu0 0.0
        %741 = vmatpush.msra.mxu0 0.0
        %742 = vmatpush.msra.mxu0 0.0
        %v743 = vand.u32 %v312, 4294901760
        %744 = vmatpush.msra.mxu0 %v743
        %v745 = vand.u32 %v310, 4294901760
        %746 = vmatpush.msra.mxu0 %v745
        %v747 = vand.u32 %v308, 4294901760
        %748 = vmatpush.msra.mxu0 %v747
        %v749 = vand.u32 %v306, 4294901760
        %750 = vmatpush.msra.mxu0 %v749
        %v751 = vand.u32 %v729, 4294901760
        %v752 = vsub.f32 %v729, %v751
        %v753 = vand.u32 %v752, 4294901760
        %v754 = vsub.f32 %v752, %v753
        %v755 = vand.u32 %v754, 4294901760
        %756 = vmatmul.f32.gmra.mxu0 %v755
        %v757 = vpop.f32.mrf.mxu0
        %v758 = vadd.f32 0.0, %v757
        %759 = vdwg.mxu0
        %760 = vmatpush.msra.mxu0 0.0
        %761 = vmatpush.msra.mxu0 0.0
        %762 = vmatpush.msra.mxu0 0.0
        %763 = vmatpush.msra.mxu0 0.0
        %764 = vmatpush.msra.mxu0 0.0
        %765 = vmatpush.msra.mxu0 0.0
        %766 = vmatpush.msra.mxu0 0.0
        %767 = vmatpush.msra.mxu0 0.0
        %768 = vmatpush.msra.mxu0 0.0
        %769 = vmatpush.msra.mxu0 0.0
        %770 = vmatpush.msra.mxu0 0.0
        %771 = vmatpush.msra.mxu0 0.0
        %v772 = vand.u32 %v312, 4294901760
        %v773 = vsub.f32 %v312, %v772
        %v774 = vand.u32 %v773, 4294901760
        %v775 = vsub.f32 %v773, %v774
        %v776 = vand.u32 %v775, 4294901760
        %777 = vmatpush.msra.mxu0 %v776
        %v778 = vand.u32 %v310, 4294901760
        %v779 = vsub.f32 %v310, %v778
        %v780 = vand.u32 %v779, 4294901760
        %v781 = vsub.f32 %v779, %v780
        %v782 = vand.u32 %v781, 4294901760
        %783 = vmatpush.msra.mxu0 %v782
        %v784 = vand.u32 %v308, 4294901760
        %v785 = vsub.f32 %v308, %v784
        %v786 = vand.u32 %v785, 4294901760
        %v787 = vsub.f32 %v785, %v786
        %v788 = vand.u32 %v787, 4294901760
        %789 = vmatpush.msra.mxu0 %v788
        %v790 = vand.u32 %v306, 4294901760
        %v791 = vsub.f32 %v306, %v790
        %v792 = vand.u32 %v791, 4294901760
        %v793 = vsub.f32 %v791, %v792
        %v794 = vand.u32 %v793, 4294901760
        %795 = vmatpush.msra.mxu0 %v794
        %v796 = vand.u32 %v729, 4294901760
        %797 = vmatmul.f32.gmra.mxu0 %v796
        %v798 = vpop.f32.mrf.mxu0
        %v799 = vadd.f32 %v758, %v798
        %800 = vdwg.mxu0
        %801 = vmatpush.msra.mxu0 0.0
        %802 = vmatpush.msra.mxu0 0.0
        %803 = vmatpush.msra.mxu0 0.0
        %804 = vmatpush.msra.mxu0 0.0
        %805 = vmatpush.msra.mxu0 0.0
        %806 = vmatpush.msra.mxu0 0.0
        %807 = vmatpush.msra.mxu0 0.0
        %808 = vmatpush.msra.mxu0 0.0
        %809 = vmatpush.msra.mxu0 0.0
        %810 = vmatpush.msra.mxu0 0.0
        %811 = vmatpush.msra.mxu0 0.0
        %812 = vmatpush.msra.mxu0 0.0
        %v813 = vand.u32 %v312, 4294901760
        %v814 = vsub.f32 %v312, %v813
        %815 = vmatpush.msra.mxu0 %v814
        %v816 = vand.u32 %v310, 4294901760
        %v817 = vsub.f32 %v310, %v816
        %818 = vmatpush.msra.mxu0 %v817
        %v819 = vand.u32 %v308, 4294901760
        %v820 = vsub.f32 %v308, %v819
        %821 = vmatpush.msra.mxu0 %v820
        %v822 = vand.u32 %v306, 4294901760
        %v823 = vsub.f32 %v306, %v822
        %824 = vmatpush.msra.mxu0 %v823
        %v825 = vand.u32 %v729, 4294901760
        %v826 = vsub.f32 %v729, %v825
        %827 = vmatmul.f32.gmra.mxu0 %v826
        %v828 = vpop.f32.mrf.mxu0
        %v829 = vadd.f32 %v799, %v828
        %830 = vdwg.mxu0
        %831 = vmatpush.msra.mxu0 0.0
        %832 = vmatpush.msra.mxu0 0.0
        %833 = vmatpush.msra.mxu0 0.0
        %834 = vmatpush.msra.mxu0 0.0
        %835 = vmatpush.msra.mxu0 0.0
        %836 = vmatpush.msra.mxu0 0.0
        %837 = vmatpush.msra.mxu0 0.0
        %838 = vmatpush.msra.mxu0 0.0
        %839 = vmatpush.msra.mxu0 0.0
        %840 = vmatpush.msra.mxu0 0.0
        %841 = vmatpush.msra.mxu0 0.0
        %842 = vmatpush.msra.mxu0 0.0
        %v843 = vand.u32 %v312, 4294901760
        %844 = vmatpush.msra.mxu0 %v843
        %v845 = vand.u32 %v310, 4294901760
        %846 = vmatpush.msra.mxu0 %v845
        %v847 = vand.u32 %v308, 4294901760
        %848 = vmatpush.msra.mxu0 %v847
        %v849 = vand.u32 %v306, 4294901760
        %850 = vmatpush.msra.mxu0 %v849
        %v851 = vand.u32 %v729, 4294901760
        %v852 = vsub.f32 %v729, %v851
        %v853 = vand.u32 %v852, 4294901760
        %854 = vmatmul.f32.gmra.mxu0 %v853
        %v855 = vpop.f32.mrf.mxu0
        %v856 = vadd.f32 %v829, %v855
        %857 = vdwg.mxu0
        %858 = vmatpush.msra.mxu0 0.0
        %859 = vmatpush.msra.mxu0 0.0
        %860 = vmatpush.msra.mxu0 0.0
        %861 = vmatpush.msra.mxu0 0.0
        %862 = vmatpush.msra.mxu0 0.0
        %863 = vmatpush.msra.mxu0 0.0
        %864 = vmatpush.msra.mxu0 0.0
        %865 = vmatpush.msra.mxu0 0.0
        %866 = vmatpush.msra.mxu0 0.0
        %867 = vmatpush.msra.mxu0 0.0
        %868 = vmatpush.msra.mxu0 0.0
        %869 = vmatpush.msra.mxu0 0.0
        %v870 = vand.u32 %v312, 4294901760
        %v871 = vsub.f32 %v312, %v870
        %v872 = vand.u32 %v871, 4294901760
        %873 = vmatpush.msra.mxu0 %v872
        %v874 = vand.u32 %v310, 4294901760
        %v875 = vsub.f32 %v310, %v874
        %v876 = vand.u32 %v875, 4294901760
        %877 = vmatpush.msra.mxu0 %v876
        %v878 = vand.u32 %v308, 4294901760
        %v879 = vsub.f32 %v308, %v878
        %v880 = vand.u32 %v879, 4294901760
        %881 = vmatpush.msra.mxu0 %v880
        %v882 = vand.u32 %v306, 4294901760
        %v883 = vsub.f32 %v306, %v882
        %v884 = vand.u32 %v883, 4294901760
        %885 = vmatpush.msra.mxu0 %v884
        %v886 = vand.u32 %v729, 4294901760
        %887 = vmatmul.f32.gmra.mxu0 %v886
        %v888 = vpop.f32.mrf.mxu0
        %v889 = vadd.f32 %v856, %v888
        %890 = vdwg.mxu0
        %891 = vmatpush.msra.mxu0 0.0
        %892 = vmatpush.msra.mxu0 0.0
        %893 = vmatpush.msra.mxu0 0.0
        %894 = vmatpush.msra.mxu0 0.0
        %895 = vmatpush.msra.mxu0 0.0
        %896 = vmatpush.msra.mxu0 0.0
        %897 = vmatpush.msra.mxu0 0.0
        %898 = vmatpush.msra.mxu0 0.0
        %899 = vmatpush.msra.mxu0 0.0
        %900 = vmatpush.msra.mxu0 0.0
        %901 = vmatpush.msra.mxu0 0.0
        %902 = vmatpush.msra.mxu0 0.0
        %v903 = vand.u32 %v312, 4294901760
        %904 = vmatpush.msra.mxu0 %v903
        %v905 = vand.u32 %v310, 4294901760
        %906 = vmatpush.msra.mxu0 %v905
        %v907 = vand.u32 %v308, 4294901760
        %908 = vmatpush.msra.mxu0 %v907
        %v909 = vand.u32 %v306, 4294901760
        %910 = vmatpush.msra.mxu0 %v909
        %v911 = vand.u32 %v729, 4294901760
        %912 = vmatmul.f32.gmra.mxu0 %v911
        %v913 = vpop.f32.mrf.mxu0
        %v914 = vadd.f32 %v889, %v913
        %915 = vdwg.mxu0
        %916 = vmatpush.msra.mxu0 0.0
        %917 = vmatpush.msra.mxu0 0.0
        %918 = vmatpush.msra.mxu0 0.0
        %919 = vmatpush.msra.mxu0 0.0
        %920 = vmatpush.msra.mxu0 0.0
        %921 = vmatpush.msra.mxu0 0.0
        %922 = vmatpush.msra.mxu0 0.0
        %923 = vmatpush.msra.mxu0 0.0
        %924 = vmatpush.msra.mxu0 0.0
        %925 = vmatpush.msra.mxu0 0.0
        %926 = vmatpush.msra.mxu0 0.0
        %927 = vmatpush.msra.mxu0 0.0
        %v928 = vand.u32 %v313, 4294901760
        %929 = vmatpush.msra.mxu0 %v928
        %v930 = vand.u32 %v311, 4294901760
        %931 = vmatpush.msra.mxu0 %v930
        %v932 = vand.u32 %v309, 4294901760
        %933 = vmatpush.msra.mxu0 %v932
        %v934 = vand.u32 %v307, 4294901760
        %935 = vmatpush.msra.mxu0 %v934
        %v936 = vand.u32 %v729, 4294901760
        %v937 = vsub.f32 %v729, %v936
        %v938 = vand.u32 %v937, 4294901760
        %v939 = vsub.f32 %v937, %v938
        %v940 = vand.u32 %v939, 4294901760
        %941 = vmatmul.f32.gmra.mxu0 %v940
        %v942 = vpop.f32.mrf.mxu0
        %v943 = vadd.f32 0.0, %v942
        %944 = vdwg.mxu0
        %945 = vmatpush.msra.mxu0 0.0
        %946 = vmatpush.msra.mxu0 0.0
        %947 = vmatpush.msra.mxu0 0.0
        %948 = vmatpush.msra.mxu0 0.0
        %949 = vmatpush.msra.mxu0 0.0
        %950 = vmatpush.msra.mxu0 0.0
        %951 = vmatpush.msra.mxu0 0.0
        %952 = vmatpush.msra.mxu0 0.0
        %953 = vmatpush.msra.mxu0 0.0
        %954 = vmatpush.msra.mxu0 0.0
        %955 = vmatpush.msra.mxu0 0.0
        %956 = vmatpush.msra.mxu0 0.0
        %v957 = vand.u32 %v313, 4294901760
        %v958 = vsub.f32 %v313, %v957
        %v959 = vand.u32 %v958, 4294901760
        %v960 = vsub.f32 %v958, %v959
        %v961 = vand.u32 %v960, 4294901760
        %962 = vmatpush.msra.mxu0 %v961
        %v963 = vand.u32 %v311, 4294901760
        %v964 = vsub.f32 %v311, %v963
        %v965 = vand.u32 %v964, 4294901760
        %v966 = vsub.f32 %v964, %v965
        %v967 = vand.u32 %v966, 4294901760
        %968 = vmatpush.msra.mxu0 %v967
        %v969 = vand.u32 %v309, 4294901760
        %v970 = vsub.f32 %v309, %v969
        %v971 = vand.u32 %v970, 4294901760
        %v972 = vsub.f32 %v970, %v971
        %v973 = vand.u32 %v972, 4294901760
        %974 = vmatpush.msra.mxu0 %v973
        %v975 = vand.u32 %v307, 4294901760
        %v976 = vsub.f32 %v307, %v975
        %v977 = vand.u32 %v976, 4294901760
        %v978 = vsub.f32 %v976, %v977
        %v979 = vand.u32 %v978, 4294901760
        %980 = vmatpush.msra.mxu0 %v979
        %v981 = vand.u32 %v729, 4294901760
        %982 = vmatmul.f32.gmra.mxu0 %v981
        %v983 = vpop.f32.mrf.mxu0
        %v984 = vadd.f32 %v943, %v983
        %985 = vdwg.mxu0
        %986 = vmatpush.msra.mxu0 0.0
        %987 = vmatpush.msra.mxu0 0.0
        %988 = vmatpush.msra.mxu0 0.0
        %989 = vmatpush.msra.mxu0 0.0
        %990 = vmatpush.msra.mxu0 0.0
        %991 = vmatpush.msra.mxu0 0.0
        %992 = vmatpush.msra.mxu0 0.0
        %993 = vmatpush.msra.mxu0 0.0
        %994 = vmatpush.msra.mxu0 0.0
        %995 = vmatpush.msra.mxu0 0.0
        %996 = vmatpush.msra.mxu0 0.0
        %997 = vmatpush.msra.mxu0 0.0
        %v998 = vand.u32 %v313, 4294901760
        %v999 = vsub.f32 %v313, %v998
        %1000 = vmatpush.msra.mxu0 %v999
        %v1001 = vand.u32 %v311, 4294901760
        %v1002 = vsub.f32 %v311, %v1001
        %1003 = vmatpush.msra.mxu0 %v1002
        %v1004 = vand.u32 %v309, 4294901760
        %v1005 = vsub.f32 %v309, %v1004
        %1006 = vmatpush.msra.mxu0 %v1005
        %v1007 = vand.u32 %v307, 4294901760
        %v1008 = vsub.f32 %v307, %v1007
        %1009 = vmatpush.msra.mxu0 %v1008
        %v1010 = vand.u32 %v729, 4294901760
        %v1011 = vsub.f32 %v729, %v1010
        %1012 = vmatmul.f32.gmra.mxu0 %v1011
        %v1013 = vpop.f32.mrf.mxu0
        %v1014 = vadd.f32 %v984, %v1013
        %1015 = vdwg.mxu0
        %1016 = vmatpush.msra.mxu0 0.0
        %1017 = vmatpush.msra.mxu0 0.0
        %1018 = vmatpush.msra.mxu0 0.0
        %1019 = vmatpush.msra.mxu0 0.0
        %1020 = vmatpush.msra.mxu0 0.0
        %1021 = vmatpush.msra.mxu0 0.0
        %1022 = vmatpush.msra.mxu0 0.0
        %1023 = vmatpush.msra.mxu0 0.0
        %1024 = vmatpush.msra.mxu0 0.0
        %1025 = vmatpush.msra.mxu0 0.0
        %1026 = vmatpush.msra.mxu0 0.0
        %1027 = vmatpush.msra.mxu0 0.0
        %v1028 = vand.u32 %v313, 4294901760
        %1029 = vmatpush.msra.mxu0 %v1028
        %v1030 = vand.u32 %v311, 4294901760
        %1031 = vmatpush.msra.mxu0 %v1030
        %v1032 = vand.u32 %v309, 4294901760
        %1033 = vmatpush.msra.mxu0 %v1032
        %v1034 = vand.u32 %v307, 4294901760
        %1035 = vmatpush.msra.mxu0 %v1034
        %v1036 = vand.u32 %v729, 4294901760
        %v1037 = vsub.f32 %v729, %v1036
        %v1038 = vand.u32 %v1037, 4294901760
        %1039 = vmatmul.f32.gmra.mxu0 %v1038
        %v1040 = vpop.f32.mrf.mxu0
        %v1041 = vadd.f32 %v1014, %v1040
        %1042 = vdwg.mxu0
        %1043 = vmatpush.msra.mxu0 0.0
        %1044 = vmatpush.msra.mxu0 0.0
        %1045 = vmatpush.msra.mxu0 0.0
        %1046 = vmatpush.msra.mxu0 0.0
        %1047 = vmatpush.msra.mxu0 0.0
        %1048 = vmatpush.msra.mxu0 0.0
        %1049 = vmatpush.msra.mxu0 0.0
        %1050 = vmatpush.msra.mxu0 0.0
        %1051 = vmatpush.msra.mxu0 0.0
        %1052 = vmatpush.msra.mxu0 0.0
        %1053 = vmatpush.msra.mxu0 0.0
        %1054 = vmatpush.msra.mxu0 0.0
        %v1055 = vand.u32 %v313, 4294901760
        %v1056 = vsub.f32 %v313, %v1055
        %v1057 = vand.u32 %v1056, 4294901760
        %1058 = vmatpush.msra.mxu0 %v1057
        %v1059 = vand.u32 %v311, 4294901760
        %v1060 = vsub.f32 %v311, %v1059
        %v1061 = vand.u32 %v1060, 4294901760
        %1062 = vmatpush.msra.mxu0 %v1061
        %v1063 = vand.u32 %v309, 4294901760
        %v1064 = vsub.f32 %v309, %v1063
        %v1065 = vand.u32 %v1064, 4294901760
        %1066 = vmatpush.msra.mxu0 %v1065
        %v1067 = vand.u32 %v307, 4294901760
        %v1068 = vsub.f32 %v307, %v1067
        %v1069 = vand.u32 %v1068, 4294901760
        %1070 = vmatpush.msra.mxu0 %v1069
        %v1071 = vand.u32 %v729, 4294901760
        %1072 = vmatmul.f32.gmra.mxu0 %v1071
        %v1073 = vpop.f32.mrf.mxu0
        %v1074 = vadd.f32 %v1041, %v1073
        %1075 = vdwg.mxu0
        %1076 = vmatpush.msra.mxu0 0.0
        %1077 = vmatpush.msra.mxu0 0.0
        %1078 = vmatpush.msra.mxu0 0.0
        %1079 = vmatpush.msra.mxu0 0.0
        %1080 = vmatpush.msra.mxu0 0.0
        %1081 = vmatpush.msra.mxu0 0.0
        %1082 = vmatpush.msra.mxu0 0.0
        %1083 = vmatpush.msra.mxu0 0.0
        %1084 = vmatpush.msra.mxu0 0.0
        %1085 = vmatpush.msra.mxu0 0.0
        %1086 = vmatpush.msra.mxu0 0.0
        %1087 = vmatpush.msra.mxu0 0.0
        %v1088 = vand.u32 %v313, 4294901760
        %1089 = vmatpush.msra.mxu0 %v1088
        %v1090 = vand.u32 %v311, 4294901760
        %1091 = vmatpush.msra.mxu0 %v1090
        %v1092 = vand.u32 %v309, 4294901760
        %1093 = vmatpush.msra.mxu0 %v1092
        %v1094 = vand.u32 %v307, 4294901760
        %1095 = vmatpush.msra.mxu0 %v1094
        %v1096 = vand.u32 %v729, 4294901760
        %1097 = vmatmul.f32.gmra.mxu0 %v1096
        %v1098 = vpop.f32.mrf.mxu0
        %v1099 = vadd.f32 %v1074, %v1098
        %1100 = vdwg.mxu0
        %v1101 = vmul.f32 %v346, %v541
        %v1102 = vmul.f32 %v347, %v726
        %v1103 = vand.u32 %v329, 4294901760
        %1104 = vmatpush.msra.mxu0 %v1103
        %v1105 = vand.u32 %v328, 4294901760
        %1106 = vmatpush.msra.mxu0 %v1105
        %v1107 = vand.u32 %v327, 4294901760
        %1108 = vmatpush.msra.mxu0 %v1107
        %v1109 = vand.u32 %v326, 4294901760
        %1110 = vmatpush.msra.mxu0 %v1109
        %v1111 = vand.u32 %v325, 4294901760
        %1112 = vmatpush.msra.mxu0 %v1111
        %v1113 = vand.u32 %v324, 4294901760
        %1114 = vmatpush.msra.mxu0 %v1113
        %v1115 = vand.u32 %v323, 4294901760
        %1116 = vmatpush.msra.mxu0 %v1115
        %v1117 = vand.u32 %v322, 4294901760
        %1118 = vmatpush.msra.mxu0 %v1117
        %v1119 = vand.u32 %v321, 4294901760
        %1120 = vmatpush.msra.mxu0 %v1119
        %v1121 = vand.u32 %v320, 4294901760
        %1122 = vmatpush.msra.mxu0 %v1121
        %v1123 = vand.u32 %v319, 4294901760
        %1124 = vmatpush.msra.mxu0 %v1123
        %v1125 = vand.u32 %v318, 4294901760
        %1126 = vmatpush.msra.mxu0 %v1125
        %v1127 = vand.u32 %v317, 4294901760
        %1128 = vmatpush.msra.mxu0 %v1127
        %v1129 = vand.u32 %v316, 4294901760
        %1130 = vmatpush.msra.mxu0 %v1129
        %v1131 = vand.u32 %v315, 4294901760
        %1132 = vmatpush.msra.mxu0 %v1131
        %v1133 = vand.u32 %v314, 4294901760
        %1134 = vmatpush.msra.mxu0 %v1133
        %v1135 = vand.u32 %v1101, 4294901760
        %v1136 = vsub.f32 %v1101, %v1135
        %v1137 = vand.u32 %v1136, 4294901760
        %v1138 = vsub.f32 %v1136, %v1137
        %v1139 = vand.u32 %v1138, 4294901760
        %1140 = vmatmul.f32.gmra.mxu0 %v1139
        %v1141 = vpop.f32.mrf.mxu0
        %v1142 = vadd.f32 0.0, %v1141
        %1143 = vdwg.mxu0
        %v1144 = vand.u32 %v329, 4294901760
        %v1145 = vsub.f32 %v329, %v1144
        %v1146 = vand.u32 %v1145, 4294901760
        %v1147 = vsub.f32 %v1145, %v1146
        %v1148 = vand.u32 %v1147, 4294901760
        %1149 = vmatpush.msra.mxu0 %v1148
        %v1150 = vand.u32 %v328, 4294901760
        %v1151 = vsub.f32 %v328, %v1150
        %v1152 = vand.u32 %v1151, 4294901760
        %v1153 = vsub.f32 %v1151, %v1152
        %v1154 = vand.u32 %v1153, 4294901760
        %1155 = vmatpush.msra.mxu0 %v1154
        %v1156 = vand.u32 %v327, 4294901760
        %v1157 = vsub.f32 %v327, %v1156
        %v1158 = vand.u32 %v1157, 4294901760
        %v1159 = vsub.f32 %v1157, %v1158
        %v1160 = vand.u32 %v1159, 4294901760
        %1161 = vmatpush.msra.mxu0 %v1160
        %v1162 = vand.u32 %v326, 4294901760
        %v1163 = vsub.f32 %v326, %v1162
        %v1164 = vand.u32 %v1163, 4294901760
        %v1165 = vsub.f32 %v1163, %v1164
        %v1166 = vand.u32 %v1165, 4294901760
        %1167 = vmatpush.msra.mxu0 %v1166
        %v1168 = vand.u32 %v325, 4294901760
        %v1169 = vsub.f32 %v325, %v1168
        %v1170 = vand.u32 %v1169, 4294901760
        %v1171 = vsub.f32 %v1169, %v1170
        %v1172 = vand.u32 %v1171, 4294901760
        %1173 = vmatpush.msra.mxu0 %v1172
        %v1174 = vand.u32 %v324, 4294901760
        %v1175 = vsub.f32 %v324, %v1174
        %v1176 = vand.u32 %v1175, 4294901760
        %v1177 = vsub.f32 %v1175, %v1176
        %v1178 = vand.u32 %v1177, 4294901760
        %1179 = vmatpush.msra.mxu0 %v1178
        %v1180 = vand.u32 %v323, 4294901760
        %v1181 = vsub.f32 %v323, %v1180
        %v1182 = vand.u32 %v1181, 4294901760
        %v1183 = vsub.f32 %v1181, %v1182
        %v1184 = vand.u32 %v1183, 4294901760
        %1185 = vmatpush.msra.mxu0 %v1184
        %v1186 = vand.u32 %v322, 4294901760
        %v1187 = vsub.f32 %v322, %v1186
        %v1188 = vand.u32 %v1187, 4294901760
        %v1189 = vsub.f32 %v1187, %v1188
        %v1190 = vand.u32 %v1189, 4294901760
        %1191 = vmatpush.msra.mxu0 %v1190
        %v1192 = vand.u32 %v321, 4294901760
        %v1193 = vsub.f32 %v321, %v1192
        %v1194 = vand.u32 %v1193, 4294901760
        %v1195 = vsub.f32 %v1193, %v1194
        %v1196 = vand.u32 %v1195, 4294901760
        %1197 = vmatpush.msra.mxu0 %v1196
        %v1198 = vand.u32 %v320, 4294901760
        %v1199 = vsub.f32 %v320, %v1198
        %v1200 = vand.u32 %v1199, 4294901760
        %v1201 = vsub.f32 %v1199, %v1200
        %v1202 = vand.u32 %v1201, 4294901760
        %1203 = vmatpush.msra.mxu0 %v1202
        %v1204 = vand.u32 %v319, 4294901760
        %v1205 = vsub.f32 %v319, %v1204
        %v1206 = vand.u32 %v1205, 4294901760
        %v1207 = vsub.f32 %v1205, %v1206
        %v1208 = vand.u32 %v1207, 4294901760
        %1209 = vmatpush.msra.mxu0 %v1208
        %v1210 = vand.u32 %v318, 4294901760
        %v1211 = vsub.f32 %v318, %v1210
        %v1212 = vand.u32 %v1211, 4294901760
        %v1213 = vsub.f32 %v1211, %v1212
        %v1214 = vand.u32 %v1213, 4294901760
        %1215 = vmatpush.msra.mxu0 %v1214
        %v1216 = vand.u32 %v317, 4294901760
        %v1217 = vsub.f32 %v317, %v1216
        %v1218 = vand.u32 %v1217, 4294901760
        %v1219 = vsub.f32 %v1217, %v1218
        %v1220 = vand.u32 %v1219, 4294901760
        %1221 = vmatpush.msra.mxu0 %v1220
        %v1222 = vand.u32 %v316, 4294901760
        %v1223 = vsub.f32 %v316, %v1222
        %v1224 = vand.u32 %v1223, 4294901760
        %v1225 = vsub.f32 %v1223, %v1224
        %v1226 = vand.u32 %v1225, 4294901760
        %1227 = vmatpush.msra.mxu0 %v1226
        %v1228 = vand.u32 %v315, 4294901760
        %v1229 = vsub.f32 %v315, %v1228
        %v1230 = vand.u32 %v1229, 4294901760
        %v1231 = vsub.f32 %v1229, %v1230
        %v1232 = vand.u32 %v1231, 4294901760
        %1233 = vmatpush.msra.mxu0 %v1232
        %v1234 = vand.u32 %v314, 4294901760
        %v1235 = vsub.f32 %v314, %v1234
        %v1236 = vand.u32 %v1235, 4294901760
        %v1237 = vsub.f32 %v1235, %v1236
        %v1238 = vand.u32 %v1237, 4294901760
        %1239 = vmatpush.msra.mxu0 %v1238
        %v1240 = vand.u32 %v1101, 4294901760
        %1241 = vmatmul.f32.gmra.mxu0 %v1240
        %v1242 = vpop.f32.mrf.mxu0
        %v1243 = vadd.f32 %v1142, %v1242
        %1244 = vdwg.mxu0
        %v1245 = vand.u32 %v329, 4294901760
        %v1246 = vsub.f32 %v329, %v1245
        %1247 = vmatpush.msra.mxu0 %v1246
        %v1248 = vand.u32 %v328, 4294901760
        %v1249 = vsub.f32 %v328, %v1248
        %1250 = vmatpush.msra.mxu0 %v1249
        %v1251 = vand.u32 %v327, 4294901760
        %v1252 = vsub.f32 %v327, %v1251
        %1253 = vmatpush.msra.mxu0 %v1252
        %v1254 = vand.u32 %v326, 4294901760
        %v1255 = vsub.f32 %v326, %v1254
        %1256 = vmatpush.msra.mxu0 %v1255
        %v1257 = vand.u32 %v325, 4294901760
        %v1258 = vsub.f32 %v325, %v1257
        %1259 = vmatpush.msra.mxu0 %v1258
        %v1260 = vand.u32 %v324, 4294901760
        %v1261 = vsub.f32 %v324, %v1260
        %1262 = vmatpush.msra.mxu0 %v1261
        %v1263 = vand.u32 %v323, 4294901760
        %v1264 = vsub.f32 %v323, %v1263
        %1265 = vmatpush.msra.mxu0 %v1264
        %v1266 = vand.u32 %v322, 4294901760
        %v1267 = vsub.f32 %v322, %v1266
        %1268 = vmatpush.msra.mxu0 %v1267
        %v1269 = vand.u32 %v321, 4294901760
        %v1270 = vsub.f32 %v321, %v1269
        %1271 = vmatpush.msra.mxu0 %v1270
        %v1272 = vand.u32 %v320, 4294901760
        %v1273 = vsub.f32 %v320, %v1272
        %1274 = vmatpush.msra.mxu0 %v1273
        %v1275 = vand.u32 %v319, 4294901760
        %v1276 = vsub.f32 %v319, %v1275
        %1277 = vmatpush.msra.mxu0 %v1276
        %v1278 = vand.u32 %v318, 4294901760
        %v1279 = vsub.f32 %v318, %v1278
        %1280 = vmatpush.msra.mxu0 %v1279
        %v1281 = vand.u32 %v317, 4294901760
        %v1282 = vsub.f32 %v317, %v1281
        %1283 = vmatpush.msra.mxu0 %v1282
        %v1284 = vand.u32 %v316, 4294901760
        %v1285 = vsub.f32 %v316, %v1284
        %1286 = vmatpush.msra.mxu0 %v1285
        %v1287 = vand.u32 %v315, 4294901760
        %v1288 = vsub.f32 %v315, %v1287
        %1289 = vmatpush.msra.mxu0 %v1288
        %v1290 = vand.u32 %v314, 4294901760
        %v1291 = vsub.f32 %v314, %v1290
        %1292 = vmatpush.msra.mxu0 %v1291
        %v1293 = vand.u32 %v1101, 4294901760
        %v1294 = vsub.f32 %v1101, %v1293
        %1295 = vmatmul.f32.gmra.mxu0 %v1294
        %v1296 = vpop.f32.mrf.mxu0
        %v1297 = vadd.f32 %v1243, %v1296
        %1298 = vdwg.mxu0
        %v1299 = vand.u32 %v329, 4294901760
        %1300 = vmatpush.msra.mxu0 %v1299
        %v1301 = vand.u32 %v328, 4294901760
        %1302 = vmatpush.msra.mxu0 %v1301
        %v1303 = vand.u32 %v327, 4294901760
        %1304 = vmatpush.msra.mxu0 %v1303
        %v1305 = vand.u32 %v326, 4294901760
        %1306 = vmatpush.msra.mxu0 %v1305
        %v1307 = vand.u32 %v325, 4294901760
        %1308 = vmatpush.msra.mxu0 %v1307
        %v1309 = vand.u32 %v324, 4294901760
        %1310 = vmatpush.msra.mxu0 %v1309
        %v1311 = vand.u32 %v323, 4294901760
        %1312 = vmatpush.msra.mxu0 %v1311
        %v1313 = vand.u32 %v322, 4294901760
        %1314 = vmatpush.msra.mxu0 %v1313
        %v1315 = vand.u32 %v321, 4294901760
        %1316 = vmatpush.msra.mxu0 %v1315
        %v1317 = vand.u32 %v320, 4294901760
        %1318 = vmatpush.msra.mxu0 %v1317
        %v1319 = vand.u32 %v319, 4294901760
        %1320 = vmatpush.msra.mxu0 %v1319
        %v1321 = vand.u32 %v318, 4294901760
        %1322 = vmatpush.msra.mxu0 %v1321
        %v1323 = vand.u32 %v317, 4294901760
        %1324 = vmatpush.msra.mxu0 %v1323
        %v1325 = vand.u32 %v316, 4294901760
        %1326 = vmatpush.msra.mxu0 %v1325
        %v1327 = vand.u32 %v315, 4294901760
        %1328 = vmatpush.msra.mxu0 %v1327
        %v1329 = vand.u32 %v314, 4294901760
        %1330 = vmatpush.msra.mxu0 %v1329
        %v1331 = vand.u32 %v1101, 4294901760
        %v1332 = vsub.f32 %v1101, %v1331
        %v1333 = vand.u32 %v1332, 4294901760
        %1334 = vmatmul.f32.gmra.mxu0 %v1333
        %v1335 = vpop.f32.mrf.mxu0
        %v1336 = vadd.f32 %v1297, %v1335
        %1337 = vdwg.mxu0
        %v1338 = vand.u32 %v329, 4294901760
        %v1339 = vsub.f32 %v329, %v1338
        %v1340 = vand.u32 %v1339, 4294901760
        %1341 = vmatpush.msra.mxu0 %v1340
        %v1342 = vand.u32 %v328, 4294901760
        %v1343 = vsub.f32 %v328, %v1342
        %v1344 = vand.u32 %v1343, 4294901760
        %1345 = vmatpush.msra.mxu0 %v1344
        %v1346 = vand.u32 %v327, 4294901760
        %v1347 = vsub.f32 %v327, %v1346
        %v1348 = vand.u32 %v1347, 4294901760
        %1349 = vmatpush.msra.mxu0 %v1348
        %v1350 = vand.u32 %v326, 4294901760
        %v1351 = vsub.f32 %v326, %v1350
        %v1352 = vand.u32 %v1351, 4294901760
        %1353 = vmatpush.msra.mxu0 %v1352
        %v1354 = vand.u32 %v325, 4294901760
        %v1355 = vsub.f32 %v325, %v1354
        %v1356 = vand.u32 %v1355, 4294901760
        %1357 = vmatpush.msra.mxu0 %v1356
        %v1358 = vand.u32 %v324, 4294901760
        %v1359 = vsub.f32 %v324, %v1358
        %v1360 = vand.u32 %v1359, 4294901760
        %1361 = vmatpush.msra.mxu0 %v1360
        %v1362 = vand.u32 %v323, 4294901760
        %v1363 = vsub.f32 %v323, %v1362
        %v1364 = vand.u32 %v1363, 4294901760
        %1365 = vmatpush.msra.mxu0 %v1364
        %v1366 = vand.u32 %v322, 4294901760
        %v1367 = vsub.f32 %v322, %v1366
        %v1368 = vand.u32 %v1367, 4294901760
        %1369 = vmatpush.msra.mxu0 %v1368
        %v1370 = vand.u32 %v321, 4294901760
        %v1371 = vsub.f32 %v321, %v1370
        %v1372 = vand.u32 %v1371, 4294901760
        %1373 = vmatpush.msra.mxu0 %v1372
        %v1374 = vand.u32 %v320, 4294901760
        %v1375 = vsub.f32 %v320, %v1374
        %v1376 = vand.u32 %v1375, 4294901760
        %1377 = vmatpush.msra.mxu0 %v1376
        %v1378 = vand.u32 %v319, 4294901760
        %v1379 = vsub.f32 %v319, %v1378
        %v1380 = vand.u32 %v1379, 4294901760
        %1381 = vmatpush.msra.mxu0 %v1380
        %v1382 = vand.u32 %v318, 4294901760
        %v1383 = vsub.f32 %v318, %v1382
        %v1384 = vand.u32 %v1383, 4294901760
        %1385 = vmatpush.msra.mxu0 %v1384
        %v1386 = vand.u32 %v317, 4294901760
        %v1387 = vsub.f32 %v317, %v1386
        %v1388 = vand.u32 %v1387, 4294901760
        %1389 = vmatpush.msra.mxu0 %v1388
        %v1390 = vand.u32 %v316, 4294901760
        %v1391 = vsub.f32 %v316, %v1390
        %v1392 = vand.u32 %v1391, 4294901760
        %1393 = vmatpush.msra.mxu0 %v1392
        %v1394 = vand.u32 %v315, 4294901760
        %v1395 = vsub.f32 %v315, %v1394
        %v1396 = vand.u32 %v1395, 4294901760
        %1397 = vmatpush.msra.mxu0 %v1396
        %v1398 = vand.u32 %v314, 4294901760
        %v1399 = vsub.f32 %v314, %v1398
        %v1400 = vand.u32 %v1399, 4294901760
        %1401 = vmatpush.msra.mxu0 %v1400
        %v1402 = vand.u32 %v1101, 4294901760
        %1403 = vmatmul.f32.gmra.mxu0 %v1402
        %v1404 = vpop.f32.mrf.mxu0
        %v1405 = vadd.f32 %v1336, %v1404
        %1406 = vdwg.mxu0
        %v1407 = vand.u32 %v329, 4294901760
        %1408 = vmatpush.msra.mxu0 %v1407
        %v1409 = vand.u32 %v328, 4294901760
        %1410 = vmatpush.msra.mxu0 %v1409
        %v1411 = vand.u32 %v327, 4294901760
        %1412 = vmatpush.msra.mxu0 %v1411
        %v1413 = vand.u32 %v326, 4294901760
        %1414 = vmatpush.msra.mxu0 %v1413
        %v1415 = vand.u32 %v325, 4294901760
        %1416 = vmatpush.msra.mxu0 %v1415
        %v1417 = vand.u32 %v324, 4294901760
        %1418 = vmatpush.msra.mxu0 %v1417
        %v1419 = vand.u32 %v323, 4294901760
        %1420 = vmatpush.msra.mxu0 %v1419
        %v1421 = vand.u32 %v322, 4294901760
        %1422 = vmatpush.msra.mxu0 %v1421
        %v1423 = vand.u32 %v321, 4294901760
        %1424 = vmatpush.msra.mxu0 %v1423
        %v1425 = vand.u32 %v320, 4294901760
        %1426 = vmatpush.msra.mxu0 %v1425
        %v1427 = vand.u32 %v319, 4294901760
        %1428 = vmatpush.msra.mxu0 %v1427
        %v1429 = vand.u32 %v318, 4294901760
        %1430 = vmatpush.msra.mxu0 %v1429
        %v1431 = vand.u32 %v317, 4294901760
        %1432 = vmatpush.msra.mxu0 %v1431
        %v1433 = vand.u32 %v316, 4294901760
        %1434 = vmatpush.msra.mxu0 %v1433
        %v1435 = vand.u32 %v315, 4294901760
        %1436 = vmatpush.msra.mxu0 %v1435
        %v1437 = vand.u32 %v314, 4294901760
        %1438 = vmatpush.msra.mxu0 %v1437
        %v1439 = vand.u32 %v1101, 4294901760
        %1440 = vmatmul.f32.gmra.mxu0 %v1439
        %v1441 = vpop.f32.mrf.mxu0
        %v1442 = vadd.f32 %v1405, %v1441
        %1443 = vdwg.mxu0
        %v1444 = vand.u32 %v345, 4294901760
        %1445 = vmatpush.msra.mxu0 %v1444
        %v1446 = vand.u32 %v344, 4294901760
        %1447 = vmatpush.msra.mxu0 %v1446
        %v1448 = vand.u32 %v343, 4294901760
        %1449 = vmatpush.msra.mxu0 %v1448
        %v1450 = vand.u32 %v342, 4294901760
        %1451 = vmatpush.msra.mxu0 %v1450
        %v1452 = vand.u32 %v341, 4294901760
        %1453 = vmatpush.msra.mxu0 %v1452
        %v1454 = vand.u32 %v340, 4294901760
        %1455 = vmatpush.msra.mxu0 %v1454
        %v1456 = vand.u32 %v339, 4294901760
        %1457 = vmatpush.msra.mxu0 %v1456
        %v1458 = vand.u32 %v338, 4294901760
        %1459 = vmatpush.msra.mxu0 %v1458
        %v1460 = vand.u32 %v337, 4294901760
        %1461 = vmatpush.msra.mxu0 %v1460
        %v1462 = vand.u32 %v336, 4294901760
        %1463 = vmatpush.msra.mxu0 %v1462
        %v1464 = vand.u32 %v335, 4294901760
        %1465 = vmatpush.msra.mxu0 %v1464
        %v1466 = vand.u32 %v334, 4294901760
        %1467 = vmatpush.msra.mxu0 %v1466
        %v1468 = vand.u32 %v333, 4294901760
        %1469 = vmatpush.msra.mxu0 %v1468
        %v1470 = vand.u32 %v332, 4294901760
        %1471 = vmatpush.msra.mxu0 %v1470
        %v1472 = vand.u32 %v331, 4294901760
        %1473 = vmatpush.msra.mxu0 %v1472
        %v1474 = vand.u32 %v330, 4294901760
        %1475 = vmatpush.msra.mxu0 %v1474
        %v1476 = vand.u32 %v1102, 4294901760
        %v1477 = vsub.f32 %v1102, %v1476
        %v1478 = vand.u32 %v1477, 4294901760
        %v1479 = vsub.f32 %v1477, %v1478
        %v1480 = vand.u32 %v1479, 4294901760
        %1481 = vmatmul.f32.gmra.mxu0 %v1480
        %v1482 = vpop.f32.mrf.mxu0
        %v1483 = vadd.f32 %v1442, %v1482
        %1484 = vdwg.mxu0
        %v1485 = vand.u32 %v345, 4294901760
        %v1486 = vsub.f32 %v345, %v1485
        %v1487 = vand.u32 %v1486, 4294901760
        %v1488 = vsub.f32 %v1486, %v1487
        %v1489 = vand.u32 %v1488, 4294901760
        %1490 = vmatpush.msra.mxu0 %v1489
        %v1491 = vand.u32 %v344, 4294901760
        %v1492 = vsub.f32 %v344, %v1491
        %v1493 = vand.u32 %v1492, 4294901760
        %v1494 = vsub.f32 %v1492, %v1493
        %v1495 = vand.u32 %v1494, 4294901760
        %1496 = vmatpush.msra.mxu0 %v1495
        %v1497 = vand.u32 %v343, 4294901760
        %v1498 = vsub.f32 %v343, %v1497
        %v1499 = vand.u32 %v1498, 4294901760
        %v1500 = vsub.f32 %v1498, %v1499
        %v1501 = vand.u32 %v1500, 4294901760
        %1502 = vmatpush.msra.mxu0 %v1501
        %v1503 = vand.u32 %v342, 4294901760
        %v1504 = vsub.f32 %v342, %v1503
        %v1505 = vand.u32 %v1504, 4294901760
        %v1506 = vsub.f32 %v1504, %v1505
        %v1507 = vand.u32 %v1506, 4294901760
        %1508 = vmatpush.msra.mxu0 %v1507
        %v1509 = vand.u32 %v341, 4294901760
        %v1510 = vsub.f32 %v341, %v1509
        %v1511 = vand.u32 %v1510, 4294901760
        %v1512 = vsub.f32 %v1510, %v1511
        %v1513 = vand.u32 %v1512, 4294901760
        %1514 = vmatpush.msra.mxu0 %v1513
        %v1515 = vand.u32 %v340, 4294901760
        %v1516 = vsub.f32 %v340, %v1515
        %v1517 = vand.u32 %v1516, 4294901760
        %v1518 = vsub.f32 %v1516, %v1517
        %v1519 = vand.u32 %v1518, 4294901760
        %1520 = vmatpush.msra.mxu0 %v1519
        %v1521 = vand.u32 %v339, 4294901760
        %v1522 = vsub.f32 %v339, %v1521
        %v1523 = vand.u32 %v1522, 4294901760
        %v1524 = vsub.f32 %v1522, %v1523
        %v1525 = vand.u32 %v1524, 4294901760
        %1526 = vmatpush.msra.mxu0 %v1525
        %v1527 = vand.u32 %v338, 4294901760
        %v1528 = vsub.f32 %v338, %v1527
        %v1529 = vand.u32 %v1528, 4294901760
        %v1530 = vsub.f32 %v1528, %v1529
        %v1531 = vand.u32 %v1530, 4294901760
        %1532 = vmatpush.msra.mxu0 %v1531
        %v1533 = vand.u32 %v337, 4294901760
        %v1534 = vsub.f32 %v337, %v1533
        %v1535 = vand.u32 %v1534, 4294901760
        %v1536 = vsub.f32 %v1534, %v1535
        %v1537 = vand.u32 %v1536, 4294901760
        %1538 = vmatpush.msra.mxu0 %v1537
        %v1539 = vand.u32 %v336, 4294901760
        %v1540 = vsub.f32 %v336, %v1539
        %v1541 = vand.u32 %v1540, 4294901760
        %v1542 = vsub.f32 %v1540, %v1541
        %v1543 = vand.u32 %v1542, 4294901760
        %1544 = vmatpush.msra.mxu0 %v1543
        %v1545 = vand.u32 %v335, 4294901760
        %v1546 = vsub.f32 %v335, %v1545
        %v1547 = vand.u32 %v1546, 4294901760
        %v1548 = vsub.f32 %v1546, %v1547
        %v1549 = vand.u32 %v1548, 4294901760
        %1550 = vmatpush.msra.mxu0 %v1549
        %v1551 = vand.u32 %v334, 4294901760
        %v1552 = vsub.f32 %v334, %v1551
        %v1553 = vand.u32 %v1552, 4294901760
        %v1554 = vsub.f32 %v1552, %v1553
        %v1555 = vand.u32 %v1554, 4294901760
        %1556 = vmatpush.msra.mxu0 %v1555
        %v1557 = vand.u32 %v333, 4294901760
        %v1558 = vsub.f32 %v333, %v1557
        %v1559 = vand.u32 %v1558, 4294901760
        %v1560 = vsub.f32 %v1558, %v1559
        %v1561 = vand.u32 %v1560, 4294901760
        %1562 = vmatpush.msra.mxu0 %v1561
        %v1563 = vand.u32 %v332, 4294901760
        %v1564 = vsub.f32 %v332, %v1563
        %v1565 = vand.u32 %v1564, 4294901760
        %v1566 = vsub.f32 %v1564, %v1565
        %v1567 = vand.u32 %v1566, 4294901760
        %1568 = vmatpush.msra.mxu0 %v1567
        %v1569 = vand.u32 %v331, 4294901760
        %v1570 = vsub.f32 %v331, %v1569
        %v1571 = vand.u32 %v1570, 4294901760
        %v1572 = vsub.f32 %v1570, %v1571
        %v1573 = vand.u32 %v1572, 4294901760
        %1574 = vmatpush.msra.mxu0 %v1573
        %v1575 = vand.u32 %v330, 4294901760
        %v1576 = vsub.f32 %v330, %v1575
        %v1577 = vand.u32 %v1576, 4294901760
        %v1578 = vsub.f32 %v1576, %v1577
        %v1579 = vand.u32 %v1578, 4294901760
        %1580 = vmatpush.msra.mxu0 %v1579
        %v1581 = vand.u32 %v1102, 4294901760
        %1582 = vmatmul.f32.gmra.mxu0 %v1581
        %v1583 = vpop.f32.mrf.mxu0
        %v1584 = vadd.f32 %v1483, %v1583
        %1585 = vdwg.mxu0
        %v1586 = vand.u32 %v345, 4294901760
        %v1587 = vsub.f32 %v345, %v1586
        %1588 = vmatpush.msra.mxu0 %v1587
        %v1589 = vand.u32 %v344, 4294901760
        %v1590 = vsub.f32 %v344, %v1589
        %1591 = vmatpush.msra.mxu0 %v1590
        %v1592 = vand.u32 %v343, 4294901760
        %v1593 = vsub.f32 %v343, %v1592
        %1594 = vmatpush.msra.mxu0 %v1593
        %v1595 = vand.u32 %v342, 4294901760
        %v1596 = vsub.f32 %v342, %v1595
        %1597 = vmatpush.msra.mxu0 %v1596
        %v1598 = vand.u32 %v341, 4294901760
        %v1599 = vsub.f32 %v341, %v1598
        %1600 = vmatpush.msra.mxu0 %v1599
        %v1601 = vand.u32 %v340, 4294901760
        %v1602 = vsub.f32 %v340, %v1601
        %1603 = vmatpush.msra.mxu0 %v1602
        %v1604 = vand.u32 %v339, 4294901760
        %v1605 = vsub.f32 %v339, %v1604
        %1606 = vmatpush.msra.mxu0 %v1605
        %v1607 = vand.u32 %v338, 4294901760
        %v1608 = vsub.f32 %v338, %v1607
        %1609 = vmatpush.msra.mxu0 %v1608
        %v1610 = vand.u32 %v337, 4294901760
        %v1611 = vsub.f32 %v337, %v1610
        %1612 = vmatpush.msra.mxu0 %v1611
        %v1613 = vand.u32 %v336, 4294901760
        %v1614 = vsub.f32 %v336, %v1613
        %1615 = vmatpush.msra.mxu0 %v1614
        %v1616 = vand.u32 %v335, 4294901760
        %v1617 = vsub.f32 %v335, %v1616
        %1618 = vmatpush.msra.mxu0 %v1617
        %v1619 = vand.u32 %v334, 4294901760
        %v1620 = vsub.f32 %v334, %v1619
        %1621 = vmatpush.msra.mxu0 %v1620
        %v1622 = vand.u32 %v333, 4294901760
        %v1623 = vsub.f32 %v333, %v1622
        %1624 = vmatpush.msra.mxu0 %v1623
        %v1625 = vand.u32 %v332, 4294901760
        %v1626 = vsub.f32 %v332, %v1625
        %1627 = vmatpush.msra.mxu0 %v1626
        %v1628 = vand.u32 %v331, 4294901760
        %v1629 = vsub.f32 %v331, %v1628
        %1630 = vmatpush.msra.mxu0 %v1629
        %v1631 = vand.u32 %v330, 4294901760
        %v1632 = vsub.f32 %v330, %v1631
        %1633 = vmatpush.msra.mxu0 %v1632
        %v1634 = vand.u32 %v1102, 4294901760
        %v1635 = vsub.f32 %v1102, %v1634
        %1636 = vmatmul.f32.gmra.mxu0 %v1635
        %v1637 = vpop.f32.mrf.mxu0
        %v1638 = vadd.f32 %v1584, %v1637
        %1639 = vdwg.mxu0
        %v1640 = vand.u32 %v345, 4294901760
        %1641 = vmatpush.msra.mxu0 %v1640
        %v1642 = vand.u32 %v344, 4294901760
        %1643 = vmatpush.msra.mxu0 %v1642
        %v1644 = vand.u32 %v343, 4294901760
        %1645 = vmatpush.msra.mxu0 %v1644
        %v1646 = vand.u32 %v342, 4294901760
        %1647 = vmatpush.msra.mxu0 %v1646
        %v1648 = vand.u32 %v341, 4294901760
        %1649 = vmatpush.msra.mxu0 %v1648
        %v1650 = vand.u32 %v340, 4294901760
        %1651 = vmatpush.msra.mxu0 %v1650
        %v1652 = vand.u32 %v339, 4294901760
        %1653 = vmatpush.msra.mxu0 %v1652
        %v1654 = vand.u32 %v338, 4294901760
        %1655 = vmatpush.msra.mxu0 %v1654
        %v1656 = vand.u32 %v337, 4294901760
        %1657 = vmatpush.msra.mxu0 %v1656
        %v1658 = vand.u32 %v336, 4294901760
        %1659 = vmatpush.msra.mxu0 %v1658
        %v1660 = vand.u32 %v335, 4294901760
        %1661 = vmatpush.msra.mxu0 %v1660
        %v1662 = vand.u32 %v334, 4294901760
        %1663 = vmatpush.msra.mxu0 %v1662
        %v1664 = vand.u32 %v333, 4294901760
        %1665 = vmatpush.msra.mxu0 %v1664
        %v1666 = vand.u32 %v332, 4294901760
        %1667 = vmatpush.msra.mxu0 %v1666
        %v1668 = vand.u32 %v331, 4294901760
        %1669 = vmatpush.msra.mxu0 %v1668
        %v1670 = vand.u32 %v330, 4294901760
        %1671 = vmatpush.msra.mxu0 %v1670
        %v1672 = vand.u32 %v1102, 4294901760
        %v1673 = vsub.f32 %v1102, %v1672
        %v1674 = vand.u32 %v1673, 4294901760
        %1675 = vmatmul.f32.gmra.mxu0 %v1674
        %v1676 = vpop.f32.mrf.mxu0
        %v1677 = vadd.f32 %v1638, %v1676
        %1678 = vdwg.mxu0
        %v1679 = vand.u32 %v345, 4294901760
        %v1680 = vsub.f32 %v345, %v1679
        %v1681 = vand.u32 %v1680, 4294901760
        %1682 = vmatpush.msra.mxu0 %v1681
        %v1683 = vand.u32 %v344, 4294901760
        %v1684 = vsub.f32 %v344, %v1683
        %v1685 = vand.u32 %v1684, 4294901760
        %1686 = vmatpush.msra.mxu0 %v1685
        %v1687 = vand.u32 %v343, 4294901760
        %v1688 = vsub.f32 %v343, %v1687
        %v1689 = vand.u32 %v1688, 4294901760
        %1690 = vmatpush.msra.mxu0 %v1689
        %v1691 = vand.u32 %v342, 4294901760
        %v1692 = vsub.f32 %v342, %v1691
        %v1693 = vand.u32 %v1692, 4294901760
        %1694 = vmatpush.msra.mxu0 %v1693
        %v1695 = vand.u32 %v341, 4294901760
        %v1696 = vsub.f32 %v341, %v1695
        %v1697 = vand.u32 %v1696, 4294901760
        %1698 = vmatpush.msra.mxu0 %v1697
        %v1699 = vand.u32 %v340, 4294901760
        %v1700 = vsub.f32 %v340, %v1699
        %v1701 = vand.u32 %v1700, 4294901760
        %1702 = vmatpush.msra.mxu0 %v1701
        %v1703 = vand.u32 %v339, 4294901760
        %v1704 = vsub.f32 %v339, %v1703
        %v1705 = vand.u32 %v1704, 4294901760
        %1706 = vmatpush.msra.mxu0 %v1705
        %v1707 = vand.u32 %v338, 4294901760
        %v1708 = vsub.f32 %v338, %v1707
        %v1709 = vand.u32 %v1708, 4294901760
        %1710 = vmatpush.msra.mxu0 %v1709
        %v1711 = vand.u32 %v337, 4294901760
        %v1712 = vsub.f32 %v337, %v1711
        %v1713 = vand.u32 %v1712, 4294901760
        %1714 = vmatpush.msra.mxu0 %v1713
        %v1715 = vand.u32 %v336, 4294901760
        %v1716 = vsub.f32 %v336, %v1715
        %v1717 = vand.u32 %v1716, 4294901760
        %1718 = vmatpush.msra.mxu0 %v1717
        %v1719 = vand.u32 %v335, 4294901760
        %v1720 = vsub.f32 %v335, %v1719
        %v1721 = vand.u32 %v1720, 4294901760
        %1722 = vmatpush.msra.mxu0 %v1721
        %v1723 = vand.u32 %v334, 4294901760
        %v1724 = vsub.f32 %v334, %v1723
        %v1725 = vand.u32 %v1724, 4294901760
        %1726 = vmatpush.msra.mxu0 %v1725
        %v1727 = vand.u32 %v333, 4294901760
        %v1728 = vsub.f32 %v333, %v1727
        %v1729 = vand.u32 %v1728, 4294901760
        %1730 = vmatpush.msra.mxu0 %v1729
        %v1731 = vand.u32 %v332, 4294901760
        %v1732 = vsub.f32 %v332, %v1731
        %v1733 = vand.u32 %v1732, 4294901760
        %1734 = vmatpush.msra.mxu0 %v1733
        %v1735 = vand.u32 %v331, 4294901760
        %v1736 = vsub.f32 %v331, %v1735
        %v1737 = vand.u32 %v1736, 4294901760
        %1738 = vmatpush.msra.mxu0 %v1737
        %v1739 = vand.u32 %v330, 4294901760
        %v1740 = vsub.f32 %v330, %v1739
        %v1741 = vand.u32 %v1740, 4294901760
        %1742 = vmatpush.msra.mxu0 %v1741
        %v1743 = vand.u32 %v1102, 4294901760
        %1744 = vmatmul.f32.gmra.mxu0 %v1743
        %v1745 = vpop.f32.mrf.mxu0
        %v1746 = vadd.f32 %v1677, %v1745
        %1747 = vdwg.mxu0
        %v1748 = vand.u32 %v345, 4294901760
        %1749 = vmatpush.msra.mxu0 %v1748
        %v1750 = vand.u32 %v344, 4294901760
        %1751 = vmatpush.msra.mxu0 %v1750
        %v1752 = vand.u32 %v343, 4294901760
        %1753 = vmatpush.msra.mxu0 %v1752
        %v1754 = vand.u32 %v342, 4294901760
        %1755 = vmatpush.msra.mxu0 %v1754
        %v1756 = vand.u32 %v341, 4294901760
        %1757 = vmatpush.msra.mxu0 %v1756
        %v1758 = vand.u32 %v340, 4294901760
        %1759 = vmatpush.msra.mxu0 %v1758
        %v1760 = vand.u32 %v339, 4294901760
        %1761 = vmatpush.msra.mxu0 %v1760
        %v1762 = vand.u32 %v338, 4294901760
        %1763 = vmatpush.msra.mxu0 %v1762
        %v1764 = vand.u32 %v337, 4294901760
        %1765 = vmatpush.msra.mxu0 %v1764
        %v1766 = vand.u32 %v336, 4294901760
        %1767 = vmatpush.msra.mxu0 %v1766
        %v1768 = vand.u32 %v335, 4294901760
        %1769 = vmatpush.msra.mxu0 %v1768
        %v1770 = vand.u32 %v334, 4294901760
        %1771 = vmatpush.msra.mxu0 %v1770
        %v1772 = vand.u32 %v333, 4294901760
        %1773 = vmatpush.msra.mxu0 %v1772
        %v1774 = vand.u32 %v332, 4294901760
        %1775 = vmatpush.msra.mxu0 %v1774
        %v1776 = vand.u32 %v331, 4294901760
        %1777 = vmatpush.msra.mxu0 %v1776
        %v1778 = vand.u32 %v330, 4294901760
        %1779 = vmatpush.msra.mxu0 %v1778
        %v1780 = vand.u32 %v1102, 4294901760
        %1781 = vmatmul.f32.gmra.mxu0 %v1780
        %v1782 = vpop.f32.mrf.mxu0
        %v1783 = vadd.f32 %v1746, %v1782
        %1784 = vdwg.mxu0
        %v1785 = vmul.f32 %v348, %v914
        %v1786 = vmul.f32 %v349, %v1099
        %v1787 = vand.u32 %v329, 4294901760
        %1788 = vmatpush.msra.mxu0 %v1787
        %v1789 = vand.u32 %v328, 4294901760
        %1790 = vmatpush.msra.mxu0 %v1789
        %v1791 = vand.u32 %v327, 4294901760
        %1792 = vmatpush.msra.mxu0 %v1791
        %v1793 = vand.u32 %v326, 4294901760
        %1794 = vmatpush.msra.mxu0 %v1793
        %v1795 = vand.u32 %v325, 4294901760
        %1796 = vmatpush.msra.mxu0 %v1795
        %v1797 = vand.u32 %v324, 4294901760
        %1798 = vmatpush.msra.mxu0 %v1797
        %v1799 = vand.u32 %v323, 4294901760
        %1800 = vmatpush.msra.mxu0 %v1799
        %v1801 = vand.u32 %v322, 4294901760
        %1802 = vmatpush.msra.mxu0 %v1801
        %v1803 = vand.u32 %v321, 4294901760
        %1804 = vmatpush.msra.mxu0 %v1803
        %v1805 = vand.u32 %v320, 4294901760
        %1806 = vmatpush.msra.mxu0 %v1805
        %v1807 = vand.u32 %v319, 4294901760
        %1808 = vmatpush.msra.mxu0 %v1807
        %v1809 = vand.u32 %v318, 4294901760
        %1810 = vmatpush.msra.mxu0 %v1809
        %v1811 = vand.u32 %v317, 4294901760
        %1812 = vmatpush.msra.mxu0 %v1811
        %v1813 = vand.u32 %v316, 4294901760
        %1814 = vmatpush.msra.mxu0 %v1813
        %v1815 = vand.u32 %v315, 4294901760
        %1816 = vmatpush.msra.mxu0 %v1815
        %v1817 = vand.u32 %v314, 4294901760
        %1818 = vmatpush.msra.mxu0 %v1817
        %v1819 = vand.u32 %v1785, 4294901760
        %v1820 = vsub.f32 %v1785, %v1819
        %v1821 = vand.u32 %v1820, 4294901760
        %v1822 = vsub.f32 %v1820, %v1821
        %v1823 = vand.u32 %v1822, 4294901760
        %1824 = vmatmul.f32.gmra.mxu0 %v1823
        %v1825 = vpop.f32.mrf.mxu0
        %v1826 = vadd.f32 0.0, %v1825
        %1827 = vdwg.mxu0
        %v1828 = vand.u32 %v329, 4294901760
        %v1829 = vsub.f32 %v329, %v1828
        %v1830 = vand.u32 %v1829, 4294901760
        %v1831 = vsub.f32 %v1829, %v1830
        %v1832 = vand.u32 %v1831, 4294901760
        %1833 = vmatpush.msra.mxu0 %v1832
        %v1834 = vand.u32 %v328, 4294901760
        %v1835 = vsub.f32 %v328, %v1834
        %v1836 = vand.u32 %v1835, 4294901760
        %v1837 = vsub.f32 %v1835, %v1836
        %v1838 = vand.u32 %v1837, 4294901760
        %1839 = vmatpush.msra.mxu0 %v1838
        %v1840 = vand.u32 %v327, 4294901760
        %v1841 = vsub.f32 %v327, %v1840
        %v1842 = vand.u32 %v1841, 4294901760
        %v1843 = vsub.f32 %v1841, %v1842
        %v1844 = vand.u32 %v1843, 4294901760
        %1845 = vmatpush.msra.mxu0 %v1844
        %v1846 = vand.u32 %v326, 4294901760
        %v1847 = vsub.f32 %v326, %v1846
        %v1848 = vand.u32 %v1847, 4294901760
        %v1849 = vsub.f32 %v1847, %v1848
        %v1850 = vand.u32 %v1849, 4294901760
        %1851 = vmatpush.msra.mxu0 %v1850
        %v1852 = vand.u32 %v325, 4294901760
        %v1853 = vsub.f32 %v325, %v1852
        %v1854 = vand.u32 %v1853, 4294901760
        %v1855 = vsub.f32 %v1853, %v1854
        %v1856 = vand.u32 %v1855, 4294901760
        %1857 = vmatpush.msra.mxu0 %v1856
        %v1858 = vand.u32 %v324, 4294901760
        %v1859 = vsub.f32 %v324, %v1858
        %v1860 = vand.u32 %v1859, 4294901760
        %v1861 = vsub.f32 %v1859, %v1860
        %v1862 = vand.u32 %v1861, 4294901760
        %1863 = vmatpush.msra.mxu0 %v1862
        %v1864 = vand.u32 %v323, 4294901760
        %v1865 = vsub.f32 %v323, %v1864
        %v1866 = vand.u32 %v1865, 4294901760
        %v1867 = vsub.f32 %v1865, %v1866
        %v1868 = vand.u32 %v1867, 4294901760
        %1869 = vmatpush.msra.mxu0 %v1868
        %v1870 = vand.u32 %v322, 4294901760
        %v1871 = vsub.f32 %v322, %v1870
        %v1872 = vand.u32 %v1871, 4294901760
        %v1873 = vsub.f32 %v1871, %v1872
        %v1874 = vand.u32 %v1873, 4294901760
        %1875 = vmatpush.msra.mxu0 %v1874
        %v1876 = vand.u32 %v321, 4294901760
        %v1877 = vsub.f32 %v321, %v1876
        %v1878 = vand.u32 %v1877, 4294901760
        %v1879 = vsub.f32 %v1877, %v1878
        %v1880 = vand.u32 %v1879, 4294901760
        %1881 = vmatpush.msra.mxu0 %v1880
        %v1882 = vand.u32 %v320, 4294901760
        %v1883 = vsub.f32 %v320, %v1882
        %v1884 = vand.u32 %v1883, 4294901760
        %v1885 = vsub.f32 %v1883, %v1884
        %v1886 = vand.u32 %v1885, 4294901760
        %1887 = vmatpush.msra.mxu0 %v1886
        %v1888 = vand.u32 %v319, 4294901760
        %v1889 = vsub.f32 %v319, %v1888
        %v1890 = vand.u32 %v1889, 4294901760
        %v1891 = vsub.f32 %v1889, %v1890
        %v1892 = vand.u32 %v1891, 4294901760
        %1893 = vmatpush.msra.mxu0 %v1892
        %v1894 = vand.u32 %v318, 4294901760
        %v1895 = vsub.f32 %v318, %v1894
        %v1896 = vand.u32 %v1895, 4294901760
        %v1897 = vsub.f32 %v1895, %v1896
        %v1898 = vand.u32 %v1897, 4294901760
        %1899 = vmatpush.msra.mxu0 %v1898
        %v1900 = vand.u32 %v317, 4294901760
        %v1901 = vsub.f32 %v317, %v1900
        %v1902 = vand.u32 %v1901, 4294901760
        %v1903 = vsub.f32 %v1901, %v1902
        %v1904 = vand.u32 %v1903, 4294901760
        %1905 = vmatpush.msra.mxu0 %v1904
        %v1906 = vand.u32 %v316, 4294901760
        %v1907 = vsub.f32 %v316, %v1906
        %v1908 = vand.u32 %v1907, 4294901760
        %v1909 = vsub.f32 %v1907, %v1908
        %v1910 = vand.u32 %v1909, 4294901760
        %1911 = vmatpush.msra.mxu0 %v1910
        %v1912 = vand.u32 %v315, 4294901760
        %v1913 = vsub.f32 %v315, %v1912
        %v1914 = vand.u32 %v1913, 4294901760
        %v1915 = vsub.f32 %v1913, %v1914
        %v1916 = vand.u32 %v1915, 4294901760
        %1917 = vmatpush.msra.mxu0 %v1916
        %v1918 = vand.u32 %v314, 4294901760
        %v1919 = vsub.f32 %v314, %v1918
        %v1920 = vand.u32 %v1919, 4294901760
        %v1921 = vsub.f32 %v1919, %v1920
        %v1922 = vand.u32 %v1921, 4294901760
        %1923 = vmatpush.msra.mxu0 %v1922
        %v1924 = vand.u32 %v1785, 4294901760
        %1925 = vmatmul.f32.gmra.mxu0 %v1924
        %v1926 = vpop.f32.mrf.mxu0
        %v1927 = vadd.f32 %v1826, %v1926
        %1928 = vdwg.mxu0
        %v1929 = vand.u32 %v329, 4294901760
        %v1930 = vsub.f32 %v329, %v1929
        %1931 = vmatpush.msra.mxu0 %v1930
        %v1932 = vand.u32 %v328, 4294901760
        %v1933 = vsub.f32 %v328, %v1932
        %1934 = vmatpush.msra.mxu0 %v1933
        %v1935 = vand.u32 %v327, 4294901760
        %v1936 = vsub.f32 %v327, %v1935
        %1937 = vmatpush.msra.mxu0 %v1936
        %v1938 = vand.u32 %v326, 4294901760
        %v1939 = vsub.f32 %v326, %v1938
        %1940 = vmatpush.msra.mxu0 %v1939
        %v1941 = vand.u32 %v325, 4294901760
        %v1942 = vsub.f32 %v325, %v1941
        %1943 = vmatpush.msra.mxu0 %v1942
        %v1944 = vand.u32 %v324, 4294901760
        %v1945 = vsub.f32 %v324, %v1944
        %1946 = vmatpush.msra.mxu0 %v1945
        %v1947 = vand.u32 %v323, 4294901760
        %v1948 = vsub.f32 %v323, %v1947
        %1949 = vmatpush.msra.mxu0 %v1948
        %v1950 = vand.u32 %v322, 4294901760
        %v1951 = vsub.f32 %v322, %v1950
        %1952 = vmatpush.msra.mxu0 %v1951
        %v1953 = vand.u32 %v321, 4294901760
        %v1954 = vsub.f32 %v321, %v1953
        %1955 = vmatpush.msra.mxu0 %v1954
        %v1956 = vand.u32 %v320, 4294901760
        %v1957 = vsub.f32 %v320, %v1956
        %1958 = vmatpush.msra.mxu0 %v1957
        %v1959 = vand.u32 %v319, 4294901760
        %v1960 = vsub.f32 %v319, %v1959
        %1961 = vmatpush.msra.mxu0 %v1960
        %v1962 = vand.u32 %v318, 4294901760
        %v1963 = vsub.f32 %v318, %v1962
        %1964 = vmatpush.msra.mxu0 %v1963
        %v1965 = vand.u32 %v317, 4294901760
        %v1966 = vsub.f32 %v317, %v1965
        %1967 = vmatpush.msra.mxu0 %v1966
        %v1968 = vand.u32 %v316, 4294901760
        %v1969 = vsub.f32 %v316, %v1968
        %1970 = vmatpush.msra.mxu0 %v1969
        %v1971 = vand.u32 %v315, 4294901760
        %v1972 = vsub.f32 %v315, %v1971
        %1973 = vmatpush.msra.mxu0 %v1972
        %v1974 = vand.u32 %v314, 4294901760
        %v1975 = vsub.f32 %v314, %v1974
        %1976 = vmatpush.msra.mxu0 %v1975
        %v1977 = vand.u32 %v1785, 4294901760
        %v1978 = vsub.f32 %v1785, %v1977
        %1979 = vmatmul.f32.gmra.mxu0 %v1978
        %v1980 = vpop.f32.mrf.mxu0
        %v1981 = vadd.f32 %v1927, %v1980
        %1982 = vdwg.mxu0
        %v1983 = vand.u32 %v329, 4294901760
        %1984 = vmatpush.msra.mxu0 %v1983
        %v1985 = vand.u32 %v328, 4294901760
        %1986 = vmatpush.msra.mxu0 %v1985
        %v1987 = vand.u32 %v327, 4294901760
        %1988 = vmatpush.msra.mxu0 %v1987
        %v1989 = vand.u32 %v326, 4294901760
        %1990 = vmatpush.msra.mxu0 %v1989
        %v1991 = vand.u32 %v325, 4294901760
        %1992 = vmatpush.msra.mxu0 %v1991
        %v1993 = vand.u32 %v324, 4294901760
        %1994 = vmatpush.msra.mxu0 %v1993
        %v1995 = vand.u32 %v323, 4294901760
        %1996 = vmatpush.msra.mxu0 %v1995
        %v1997 = vand.u32 %v322, 4294901760
        %1998 = vmatpush.msra.mxu0 %v1997
        %v1999 = vand.u32 %v321, 4294901760
        %2000 = vmatpush.msra.mxu0 %v1999
        %v2001 = vand.u32 %v320, 4294901760
        %2002 = vmatpush.msra.mxu0 %v2001
        %v2003 = vand.u32 %v319, 4294901760
        %2004 = vmatpush.msra.mxu0 %v2003
        %v2005 = vand.u32 %v318, 4294901760
        %2006 = vmatpush.msra.mxu0 %v2005
        %v2007 = vand.u32 %v317, 4294901760
        %2008 = vmatpush.msra.mxu0 %v2007
        %v2009 = vand.u32 %v316, 4294901760
        %2010 = vmatpush.msra.mxu0 %v2009
        %v2011 = vand.u32 %v315, 4294901760
        %2012 = vmatpush.msra.mxu0 %v2011
        %v2013 = vand.u32 %v314, 4294901760
        %2014 = vmatpush.msra.mxu0 %v2013
        %v2015 = vand.u32 %v1785, 4294901760
        %v2016 = vsub.f32 %v1785, %v2015
        %v2017 = vand.u32 %v2016, 4294901760
        %2018 = vmatmul.f32.gmra.mxu0 %v2017
        %v2019 = vpop.f32.mrf.mxu0
        %v2020 = vadd.f32 %v1981, %v2019
        %2021 = vdwg.mxu0
        %v2022 = vand.u32 %v329, 4294901760
        %v2023 = vsub.f32 %v329, %v2022
        %v2024 = vand.u32 %v2023, 4294901760
        %2025 = vmatpush.msra.mxu0 %v2024
        %v2026 = vand.u32 %v328, 4294901760
        %v2027 = vsub.f32 %v328, %v2026
        %v2028 = vand.u32 %v2027, 4294901760
        %2029 = vmatpush.msra.mxu0 %v2028
        %v2030 = vand.u32 %v327, 4294901760
        %v2031 = vsub.f32 %v327, %v2030
        %v2032 = vand.u32 %v2031, 4294901760
        %2033 = vmatpush.msra.mxu0 %v2032
        %v2034 = vand.u32 %v326, 4294901760
        %v2035 = vsub.f32 %v326, %v2034
        %v2036 = vand.u32 %v2035, 4294901760
        %2037 = vmatpush.msra.mxu0 %v2036
        %v2038 = vand.u32 %v325, 4294901760
        %v2039 = vsub.f32 %v325, %v2038
        %v2040 = vand.u32 %v2039, 4294901760
        %2041 = vmatpush.msra.mxu0 %v2040
        %v2042 = vand.u32 %v324, 4294901760
        %v2043 = vsub.f32 %v324, %v2042
        %v2044 = vand.u32 %v2043, 4294901760
        %2045 = vmatpush.msra.mxu0 %v2044
        %v2046 = vand.u32 %v323, 4294901760
        %v2047 = vsub.f32 %v323, %v2046
        %v2048 = vand.u32 %v2047, 4294901760
        %2049 = vmatpush.msra.mxu0 %v2048
        %v2050 = vand.u32 %v322, 4294901760
        %v2051 = vsub.f32 %v322, %v2050
        %v2052 = vand.u32 %v2051, 4294901760
        %2053 = vmatpush.msra.mxu0 %v2052
        %v2054 = vand.u32 %v321, 4294901760
        %v2055 = vsub.f32 %v321, %v2054
        %v2056 = vand.u32 %v2055, 4294901760
        %2057 = vmatpush.msra.mxu0 %v2056
        %v2058 = vand.u32 %v320, 4294901760
        %v2059 = vsub.f32 %v320, %v2058
        %v2060 = vand.u32 %v2059, 4294901760
        %2061 = vmatpush.msra.mxu0 %v2060
        %v2062 = vand.u32 %v319, 4294901760
        %v2063 = vsub.f32 %v319, %v2062
        %v2064 = vand.u32 %v2063, 4294901760
        %2065 = vmatpush.msra.mxu0 %v2064
        %v2066 = vand.u32 %v318, 4294901760
        %v2067 = vsub.f32 %v318, %v2066
        %v2068 = vand.u32 %v2067, 4294901760
        %2069 = vmatpush.msra.mxu0 %v2068
        %v2070 = vand.u32 %v317, 4294901760
        %v2071 = vsub.f32 %v317, %v2070
        %v2072 = vand.u32 %v2071, 4294901760
        %2073 = vmatpush.msra.mxu0 %v2072
        %v2074 = vand.u32 %v316, 4294901760
        %v2075 = vsub.f32 %v316, %v2074
        %v2076 = vand.u32 %v2075, 4294901760
        %2077 = vmatpush.msra.mxu0 %v2076
        %v2078 = vand.u32 %v315, 4294901760
        %v2079 = vsub.f32 %v315, %v2078
        %v2080 = vand.u32 %v2079, 4294901760
        %2081 = vmatpush.msra.mxu0 %v2080
        %v2082 = vand.u32 %v314, 4294901760
        %v2083 = vsub.f32 %v314, %v2082
        %v2084 = vand.u32 %v2083, 4294901760
        %2085 = vmatpush.msra.mxu0 %v2084
        %v2086 = vand.u32 %v1785, 4294901760
        %2087 = vmatmul.f32.gmra.mxu0 %v2086
        %v2088 = vpop.f32.mrf.mxu0
        %v2089 = vadd.f32 %v2020, %v2088
        %2090 = vdwg.mxu0
        %v2091 = vand.u32 %v329, 4294901760
        %2092 = vmatpush.msra.mxu0 %v2091
        %v2093 = vand.u32 %v328, 4294901760
        %2094 = vmatpush.msra.mxu0 %v2093
        %v2095 = vand.u32 %v327, 4294901760
        %2096 = vmatpush.msra.mxu0 %v2095
        %v2097 = vand.u32 %v326, 4294901760
        %2098 = vmatpush.msra.mxu0 %v2097
        %v2099 = vand.u32 %v325, 4294901760
        %2100 = vmatpush.msra.mxu0 %v2099
        %v2101 = vand.u32 %v324, 4294901760
        %2102 = vmatpush.msra.mxu0 %v2101
        %v2103 = vand.u32 %v323, 4294901760
        %2104 = vmatpush.msra.mxu0 %v2103
        %v2105 = vand.u32 %v322, 4294901760
        %2106 = vmatpush.msra.mxu0 %v2105
        %v2107 = vand.u32 %v321, 4294901760
        %2108 = vmatpush.msra.mxu0 %v2107
        %v2109 = vand.u32 %v320, 4294901760
        %2110 = vmatpush.msra.mxu0 %v2109
        %v2111 = vand.u32 %v319, 4294901760
        %2112 = vmatpush.msra.mxu0 %v2111
        %v2113 = vand.u32 %v318, 4294901760
        %2114 = vmatpush.msra.mxu0 %v2113
        %v2115 = vand.u32 %v317, 4294901760
        %2116 = vmatpush.msra.mxu0 %v2115
        %v2117 = vand.u32 %v316, 4294901760
        %2118 = vmatpush.msra.mxu0 %v2117
        %v2119 = vand.u32 %v315, 4294901760
        %2120 = vmatpush.msra.mxu0 %v2119
        %v2121 = vand.u32 %v314, 4294901760
        %2122 = vmatpush.msra.mxu0 %v2121
        %v2123 = vand.u32 %v1785, 4294901760
        %2124 = vmatmul.f32.gmra.mxu0 %v2123
        %v2125 = vpop.f32.mrf.mxu0
        %v2126 = vadd.f32 %v2089, %v2125
        %2127 = vdwg.mxu0
        %v2128 = vand.u32 %v345, 4294901760
        %2129 = vmatpush.msra.mxu0 %v2128
        %v2130 = vand.u32 %v344, 4294901760
        %2131 = vmatpush.msra.mxu0 %v2130
        %v2132 = vand.u32 %v343, 4294901760
        %2133 = vmatpush.msra.mxu0 %v2132
        %v2134 = vand.u32 %v342, 4294901760
        %2135 = vmatpush.msra.mxu0 %v2134
        %v2136 = vand.u32 %v341, 4294901760
        %2137 = vmatpush.msra.mxu0 %v2136
        %v2138 = vand.u32 %v340, 4294901760
        %2139 = vmatpush.msra.mxu0 %v2138
        %v2140 = vand.u32 %v339, 4294901760
        %2141 = vmatpush.msra.mxu0 %v2140
        %v2142 = vand.u32 %v338, 4294901760
        %2143 = vmatpush.msra.mxu0 %v2142
        %v2144 = vand.u32 %v337, 4294901760
        %2145 = vmatpush.msra.mxu0 %v2144
        %v2146 = vand.u32 %v336, 4294901760
        %2147 = vmatpush.msra.mxu0 %v2146
        %v2148 = vand.u32 %v335, 4294901760
        %2149 = vmatpush.msra.mxu0 %v2148
        %v2150 = vand.u32 %v334, 4294901760
        %2151 = vmatpush.msra.mxu0 %v2150
        %v2152 = vand.u32 %v333, 4294901760
        %2153 = vmatpush.msra.mxu0 %v2152
        %v2154 = vand.u32 %v332, 4294901760
        %2155 = vmatpush.msra.mxu0 %v2154
        %v2156 = vand.u32 %v331, 4294901760
        %2157 = vmatpush.msra.mxu0 %v2156
        %v2158 = vand.u32 %v330, 4294901760
        %2159 = vmatpush.msra.mxu0 %v2158
        %v2160 = vand.u32 %v1786, 4294901760
        %v2161 = vsub.f32 %v1786, %v2160
        %v2162 = vand.u32 %v2161, 4294901760
        %v2163 = vsub.f32 %v2161, %v2162
        %v2164 = vand.u32 %v2163, 4294901760
        %2165 = vmatmul.f32.gmra.mxu0 %v2164
        %v2166 = vpop.f32.mrf.mxu0
        %v2167 = vadd.f32 %v2126, %v2166
        %2168 = vdwg.mxu0
        %v2169 = vand.u32 %v345, 4294901760
        %v2170 = vsub.f32 %v345, %v2169
        %v2171 = vand.u32 %v2170, 4294901760
        %v2172 = vsub.f32 %v2170, %v2171
        %v2173 = vand.u32 %v2172, 4294901760
        %2174 = vmatpush.msra.mxu0 %v2173
        %v2175 = vand.u32 %v344, 4294901760
        %v2176 = vsub.f32 %v344, %v2175
        %v2177 = vand.u32 %v2176, 4294901760
        %v2178 = vsub.f32 %v2176, %v2177
        %v2179 = vand.u32 %v2178, 4294901760
        %2180 = vmatpush.msra.mxu0 %v2179
        %v2181 = vand.u32 %v343, 4294901760
        %v2182 = vsub.f32 %v343, %v2181
        %v2183 = vand.u32 %v2182, 4294901760
        %v2184 = vsub.f32 %v2182, %v2183
        %v2185 = vand.u32 %v2184, 4294901760
        %2186 = vmatpush.msra.mxu0 %v2185
        %v2187 = vand.u32 %v342, 4294901760
        %v2188 = vsub.f32 %v342, %v2187
        %v2189 = vand.u32 %v2188, 4294901760
        %v2190 = vsub.f32 %v2188, %v2189
        %v2191 = vand.u32 %v2190, 4294901760
        %2192 = vmatpush.msra.mxu0 %v2191
        %v2193 = vand.u32 %v341, 4294901760
        %v2194 = vsub.f32 %v341, %v2193
        %v2195 = vand.u32 %v2194, 4294901760
        %v2196 = vsub.f32 %v2194, %v2195
        %v2197 = vand.u32 %v2196, 4294901760
        %2198 = vmatpush.msra.mxu0 %v2197
        %v2199 = vand.u32 %v340, 4294901760
        %v2200 = vsub.f32 %v340, %v2199
        %v2201 = vand.u32 %v2200, 4294901760
        %v2202 = vsub.f32 %v2200, %v2201
        %v2203 = vand.u32 %v2202, 4294901760
        %2204 = vmatpush.msra.mxu0 %v2203
        %v2205 = vand.u32 %v339, 4294901760
        %v2206 = vsub.f32 %v339, %v2205
        %v2207 = vand.u32 %v2206, 4294901760
        %v2208 = vsub.f32 %v2206, %v2207
        %v2209 = vand.u32 %v2208, 4294901760
        %2210 = vmatpush.msra.mxu0 %v2209
        %v2211 = vand.u32 %v338, 4294901760
        %v2212 = vsub.f32 %v338, %v2211
        %v2213 = vand.u32 %v2212, 4294901760
        %v2214 = vsub.f32 %v2212, %v2213
        %v2215 = vand.u32 %v2214, 4294901760
        %2216 = vmatpush.msra.mxu0 %v2215
        %v2217 = vand.u32 %v337, 4294901760
        %v2218 = vsub.f32 %v337, %v2217
        %v2219 = vand.u32 %v2218, 4294901760
        %v2220 = vsub.f32 %v2218, %v2219
        %v2221 = vand.u32 %v2220, 4294901760
        %2222 = vmatpush.msra.mxu0 %v2221
        %v2223 = vand.u32 %v336, 4294901760
        %v2224 = vsub.f32 %v336, %v2223
        %v2225 = vand.u32 %v2224, 4294901760
        %v2226 = vsub.f32 %v2224, %v2225
        %v2227 = vand.u32 %v2226, 4294901760
        %2228 = vmatpush.msra.mxu0 %v2227
        %v2229 = vand.u32 %v335, 4294901760
        %v2230 = vsub.f32 %v335, %v2229
        %v2231 = vand.u32 %v2230, 4294901760
        %v2232 = vsub.f32 %v2230, %v2231
        %v2233 = vand.u32 %v2232, 4294901760
        %2234 = vmatpush.msra.mxu0 %v2233
        %v2235 = vand.u32 %v334, 4294901760
        %v2236 = vsub.f32 %v334, %v2235
        %v2237 = vand.u32 %v2236, 4294901760
        %v2238 = vsub.f32 %v2236, %v2237
        %v2239 = vand.u32 %v2238, 4294901760
        %2240 = vmatpush.msra.mxu0 %v2239
        %v2241 = vand.u32 %v333, 4294901760
        %v2242 = vsub.f32 %v333, %v2241
        %v2243 = vand.u32 %v2242, 4294901760
        %v2244 = vsub.f32 %v2242, %v2243
        %v2245 = vand.u32 %v2244, 4294901760
        %2246 = vmatpush.msra.mxu0 %v2245
        %v2247 = vand.u32 %v332, 4294901760
        %v2248 = vsub.f32 %v332, %v2247
        %v2249 = vand.u32 %v2248, 4294901760
        %v2250 = vsub.f32 %v2248, %v2249
        %v2251 = vand.u32 %v2250, 4294901760
        %2252 = vmatpush.msra.mxu0 %v2251
        %v2253 = vand.u32 %v331, 4294901760
        %v2254 = vsub.f32 %v331, %v2253
        %v2255 = vand.u32 %v2254, 4294901760
        %v2256 = vsub.f32 %v2254, %v2255
        %v2257 = vand.u32 %v2256, 4294901760
        %2258 = vmatpush.msra.mxu0 %v2257
        %v2259 = vand.u32 %v330, 4294901760
        %v2260 = vsub.f32 %v330, %v2259
        %v2261 = vand.u32 %v2260, 4294901760
        %v2262 = vsub.f32 %v2260, %v2261
        %v2263 = vand.u32 %v2262, 4294901760
        %2264 = vmatpush.msra.mxu0 %v2263
        %v2265 = vand.u32 %v1786, 4294901760
        %2266 = vmatmul.f32.gmra.mxu0 %v2265
        %v2267 = vpop.f32.mrf.mxu0
        %v2268 = vadd.f32 %v2167, %v2267
        %2269 = vdwg.mxu0
        %v2270 = vand.u32 %v345, 4294901760
        %v2271 = vsub.f32 %v345, %v2270
        %2272 = vmatpush.msra.mxu0 %v2271
        %v2273 = vand.u32 %v344, 4294901760
        %v2274 = vsub.f32 %v344, %v2273
        %2275 = vmatpush.msra.mxu0 %v2274
        %v2276 = vand.u32 %v343, 4294901760
        %v2277 = vsub.f32 %v343, %v2276
        %2278 = vmatpush.msra.mxu0 %v2277
        %v2279 = vand.u32 %v342, 4294901760
        %v2280 = vsub.f32 %v342, %v2279
        %2281 = vmatpush.msra.mxu0 %v2280
        %v2282 = vand.u32 %v341, 4294901760
        %v2283 = vsub.f32 %v341, %v2282
        %2284 = vmatpush.msra.mxu0 %v2283
        %v2285 = vand.u32 %v340, 4294901760
        %v2286 = vsub.f32 %v340, %v2285
        %2287 = vmatpush.msra.mxu0 %v2286
        %v2288 = vand.u32 %v339, 4294901760
        %v2289 = vsub.f32 %v339, %v2288
        %2290 = vmatpush.msra.mxu0 %v2289
        %v2291 = vand.u32 %v338, 4294901760
        %v2292 = vsub.f32 %v338, %v2291
        %2293 = vmatpush.msra.mxu0 %v2292
        %v2294 = vand.u32 %v337, 4294901760
        %v2295 = vsub.f32 %v337, %v2294
        %2296 = vmatpush.msra.mxu0 %v2295
        %v2297 = vand.u32 %v336, 4294901760
        %v2298 = vsub.f32 %v336, %v2297
        %2299 = vmatpush.msra.mxu0 %v2298
        %v2300 = vand.u32 %v335, 4294901760
        %v2301 = vsub.f32 %v335, %v2300
        %2302 = vmatpush.msra.mxu0 %v2301
        %v2303 = vand.u32 %v334, 4294901760
        %v2304 = vsub.f32 %v334, %v2303
        %2305 = vmatpush.msra.mxu0 %v2304
        %v2306 = vand.u32 %v333, 4294901760
        %v2307 = vsub.f32 %v333, %v2306
        %2308 = vmatpush.msra.mxu0 %v2307
        %v2309 = vand.u32 %v332, 4294901760
        %v2310 = vsub.f32 %v332, %v2309
        %2311 = vmatpush.msra.mxu0 %v2310
        %v2312 = vand.u32 %v331, 4294901760
        %v2313 = vsub.f32 %v331, %v2312
        %2314 = vmatpush.msra.mxu0 %v2313
        %v2315 = vand.u32 %v330, 4294901760
        %v2316 = vsub.f32 %v330, %v2315
        %2317 = vmatpush.msra.mxu0 %v2316
        %v2318 = vand.u32 %v1786, 4294901760
        %v2319 = vsub.f32 %v1786, %v2318
        %2320 = vmatmul.f32.gmra.mxu0 %v2319
        %v2321 = vpop.f32.mrf.mxu0
        %v2322 = vadd.f32 %v2268, %v2321
        %2323 = vdwg.mxu0
        %v2324 = vand.u32 %v345, 4294901760
        %2325 = vmatpush.msra.mxu0 %v2324
        %v2326 = vand.u32 %v344, 4294901760
        %2327 = vmatpush.msra.mxu0 %v2326
        %v2328 = vand.u32 %v343, 4294901760
        %2329 = vmatpush.msra.mxu0 %v2328
        %v2330 = vand.u32 %v342, 4294901760
        %2331 = vmatpush.msra.mxu0 %v2330
        %v2332 = vand.u32 %v341, 4294901760
        %2333 = vmatpush.msra.mxu0 %v2332
        %v2334 = vand.u32 %v340, 4294901760
        %2335 = vmatpush.msra.mxu0 %v2334
        %v2336 = vand.u32 %v339, 4294901760
        %2337 = vmatpush.msra.mxu0 %v2336
        %v2338 = vand.u32 %v338, 4294901760
        %2339 = vmatpush.msra.mxu0 %v2338
        %v2340 = vand.u32 %v337, 4294901760
        %2341 = vmatpush.msra.mxu0 %v2340
        %v2342 = vand.u32 %v336, 4294901760
        %2343 = vmatpush.msra.mxu0 %v2342
        %v2344 = vand.u32 %v335, 4294901760
        %2345 = vmatpush.msra.mxu0 %v2344
        %v2346 = vand.u32 %v334, 4294901760
        %2347 = vmatpush.msra.mxu0 %v2346
        %v2348 = vand.u32 %v333, 4294901760
        %2349 = vmatpush.msra.mxu0 %v2348
        %v2350 = vand.u32 %v332, 4294901760
        %2351 = vmatpush.msra.mxu0 %v2350
        %v2352 = vand.u32 %v331, 4294901760
        %2353 = vmatpush.msra.mxu0 %v2352
        %v2354 = vand.u32 %v330, 4294901760
        %2355 = vmatpush.msra.mxu0 %v2354
        %v2356 = vand.u32 %v1786, 4294901760
        %v2357 = vsub.f32 %v1786, %v2356
        %v2358 = vand.u32 %v2357, 4294901760
        %2359 = vmatmul.f32.gmra.mxu0 %v2358
        %v2360 = vpop.f32.mrf.mxu0
        %v2361 = vadd.f32 %v2322, %v2360
        %2362 = vdwg.mxu0
        %v2363 = vand.u32 %v345, 4294901760
        %v2364 = vsub.f32 %v345, %v2363
        %v2365 = vand.u32 %v2364, 4294901760
        %2366 = vmatpush.msra.mxu0 %v2365
        %v2367 = vand.u32 %v344, 4294901760
        %v2368 = vsub.f32 %v344, %v2367
        %v2369 = vand.u32 %v2368, 4294901760
        %2370 = vmatpush.msra.mxu0 %v2369
        %v2371 = vand.u32 %v343, 4294901760
        %v2372 = vsub.f32 %v343, %v2371
        %v2373 = vand.u32 %v2372, 4294901760
        %2374 = vmatpush.msra.mxu0 %v2373
        %v2375 = vand.u32 %v342, 4294901760
        %v2376 = vsub.f32 %v342, %v2375
        %v2377 = vand.u32 %v2376, 4294901760
        %2378 = vmatpush.msra.mxu0 %v2377
        %v2379 = vand.u32 %v341, 4294901760
        %v2380 = vsub.f32 %v341, %v2379
        %v2381 = vand.u32 %v2380, 4294901760
        %2382 = vmatpush.msra.mxu0 %v2381
        %v2383 = vand.u32 %v340, 4294901760
        %v2384 = vsub.f32 %v340, %v2383
        %v2385 = vand.u32 %v2384, 4294901760
        %2386 = vmatpush.msra.mxu0 %v2385
        %v2387 = vand.u32 %v339, 4294901760
        %v2388 = vsub.f32 %v339, %v2387
        %v2389 = vand.u32 %v2388, 4294901760
        %2390 = vmatpush.msra.mxu0 %v2389
        %v2391 = vand.u32 %v338, 4294901760
        %v2392 = vsub.f32 %v338, %v2391
        %v2393 = vand.u32 %v2392, 4294901760
        %2394 = vmatpush.msra.mxu0 %v2393
        %v2395 = vand.u32 %v337, 4294901760
        %v2396 = vsub.f32 %v337, %v2395
        %v2397 = vand.u32 %v2396, 4294901760
        %2398 = vmatpush.msra.mxu0 %v2397
        %v2399 = vand.u32 %v336, 4294901760
        %v2400 = vsub.f32 %v336, %v2399
        %v2401 = vand.u32 %v2400, 4294901760
        %2402 = vmatpush.msra.mxu0 %v2401
        %v2403 = vand.u32 %v335, 4294901760
        %v2404 = vsub.f32 %v335, %v2403
        %v2405 = vand.u32 %v2404, 4294901760
        %2406 = vmatpush.msra.mxu0 %v2405
        %v2407 = vand.u32 %v334, 4294901760
        %v2408 = vsub.f32 %v334, %v2407
        %v2409 = vand.u32 %v2408, 4294901760
        %2410 = vmatpush.msra.mxu0 %v2409
        %v2411 = vand.u32 %v333, 4294901760
        %v2412 = vsub.f32 %v333, %v2411
        %v2413 = vand.u32 %v2412, 4294901760
        %2414 = vmatpush.msra.mxu0 %v2413
        %v2415 = vand.u32 %v332, 4294901760
        %v2416 = vsub.f32 %v332, %v2415
        %v2417 = vand.u32 %v2416, 4294901760
        %2418 = vmatpush.msra.mxu0 %v2417
        %v2419 = vand.u32 %v331, 4294901760
        %v2420 = vsub.f32 %v331, %v2419
        %v2421 = vand.u32 %v2420, 4294901760
        %2422 = vmatpush.msra.mxu0 %v2421
        %v2423 = vand.u32 %v330, 4294901760
        %v2424 = vsub.f32 %v330, %v2423
        %v2425 = vand.u32 %v2424, 4294901760
        %2426 = vmatpush.msra.mxu0 %v2425
        %v2427 = vand.u32 %v1786, 4294901760
        %2428 = vmatmul.f32.gmra.mxu0 %v2427
        %v2429 = vpop.f32.mrf.mxu0
        %v2430 = vadd.f32 %v2361, %v2429
        %2431 = vdwg.mxu0
        %v2432 = vand.u32 %v345, 4294901760
        %2433 = vmatpush.msra.mxu0 %v2432
        %v2434 = vand.u32 %v344, 4294901760
        %2435 = vmatpush.msra.mxu0 %v2434
        %v2436 = vand.u32 %v343, 4294901760
        %2437 = vmatpush.msra.mxu0 %v2436
        %v2438 = vand.u32 %v342, 4294901760
        %2439 = vmatpush.msra.mxu0 %v2438
        %v2440 = vand.u32 %v341, 4294901760
        %2441 = vmatpush.msra.mxu0 %v2440
        %v2442 = vand.u32 %v340, 4294901760
        %2443 = vmatpush.msra.mxu0 %v2442
        %v2444 = vand.u32 %v339, 4294901760
        %2445 = vmatpush.msra.mxu0 %v2444
        %v2446 = vand.u32 %v338, 4294901760
        %2447 = vmatpush.msra.mxu0 %v2446
        %v2448 = vand.u32 %v337, 4294901760
        %2449 = vmatpush.msra.mxu0 %v2448
        %v2450 = vand.u32 %v336, 4294901760
        %2451 = vmatpush.msra.mxu0 %v2450
        %v2452 = vand.u32 %v335, 4294901760
        %2453 = vmatpush.msra.mxu0 %v2452
        %v2454 = vand.u32 %v334, 4294901760
        %2455 = vmatpush.msra.mxu0 %v2454
        %v2456 = vand.u32 %v333, 4294901760
        %2457 = vmatpush.msra.mxu0 %v2456
        %v2458 = vand.u32 %v332, 4294901760
        %2459 = vmatpush.msra.mxu0 %v2458
        %v2460 = vand.u32 %v331, 4294901760
        %2461 = vmatpush.msra.mxu0 %v2460
        %v2462 = vand.u32 %v330, 4294901760
        %2463 = vmatpush.msra.mxu0 %v2462
        %v2464 = vand.u32 %v1786, 4294901760
        %2465 = vmatmul.f32.gmra.mxu0 %v2464
        %v2466 = vpop.f32.mrf.mxu0
        %v2467 = vadd.f32 %v2430, %v2466
        %2468 = vdwg.mxu0
        %v2469 = vsub.f32 %v354, %v2467
        %v2470 = vsub.f32 0.0, %v2469
        %v2471 = vmax.f32 %v2470, 0.0
        %v2472 = vand.u32 2147483647, %v2470
        %v2473 = vsub.f32 0.0, %v2472
        %v2474 = vmul.f32 %v2473, 1.442695
        %v2475 = vpow.pop %v2474
        %v2476 = vadd.f32 %v2475, 1.0
        %v2477 = vlog2.pop %v2476
        %v2478 = vmul.f32 %v2477, 0.6931472
        %v2479 = vmul.f32 -0.5, %v2475
        %v2480 = vadd.f32 %v2479, 1.0
        %v2481 = vmul.f32 %v2480, %v2475
        %v2482 = vand.u32 2147483647, %v2475
        %vm2483 = vcmp.lt.f32.partialorder %v2482, 0.0004427343
        %v2484 = vsel %vm2483, %v2481, %v2478
        %v2485 = vadd.f32 %v2471, %v2484
        %v2486 = vsub.f32 %v354, %v1783
        %v2487 = vsub.f32 0.0, %v2486
        %v2488 = vmax.f32 %v2487, 0.0
        %v2489 = vand.u32 2147483647, %v2487
        %v2490 = vsub.f32 0.0, %v2489
        %v2491 = vmul.f32 %v2490, 1.442695
        %v2492 = vpow.pop %v2491
        %v2493 = vadd.f32 %v2492, 1.0
        %v2494 = vlog2.pop %v2493
        %v2495 = vmul.f32 %v2494, 0.6931472
        %v2496 = vmul.f32 -0.5, %v2492
        %v2497 = vadd.f32 %v2496, 1.0
        %v2498 = vmul.f32 %v2497, %v2492
        %v2499 = vand.u32 2147483647, %v2492
        %vm2500 = vcmp.lt.f32.partialorder %v2499, 0.0004427343
        %v2501 = vsel %vm2500, %v2498, %v2495
        %v2502 = vadd.f32 %v2488, %v2501
        %v2503 = vadd.f32 %v2485, %v2502
        %vm2504 = vcmask 64512
        %v2505 = vsel %vm2504, %v2503, 0.0
        %2506 = vadd.xlane.f32.xlu0 %v2505
        %v2507 = vpop.xlane.xlu0 %2506
        %v2508 = vrot.slane %v2507, 4
        %v2509 = vadd.f32 %v2507, %v2508
        %v2510 = vrot.slane %v2509, 2
        %v2511 = vadd.f32 %v2509, %v2510
        %v2512 = vrot.slane %v2511, 1
        %v2513 = vadd.f32 %v2511, %v2512
        %s2514 = vtos %v2513
        %v2515 = vstv %s2514
        %2516 = vst [vmem:[%s285] sm:$0xff] %v2515
        %s2517 = sand.u32 %s174, 1
        %s2518 = scalar_lea.sflag [#allocation3], %s2517
        %s2519 = sand.u32 %s174, 1
        %s2520 = smul.addr %s2519, 8
        %s2521 = scalar_lea.vmem [#allocation2], %s2520
        // Predicated region
        $region45: #{tpu_custom_call.1} parent=43 // pred_check
          %p2522 = pneg %p184
        $region46: #{tpu_custom_call.1} parent=43 // pred_check_branch
          %2524 = sbr.rel (%p2522) target = $region48
        $region47: #{tpu_custom_call.1} parent=43 // pred_region
          %2526 = vsyncadd %s2518, 0
          %s2527 = smul.addr %s20, 8
          %s2528 = scalar_lea.hbm %s6, %s2527
          %s2530 = sshll.u32 %s2521, 4
          %s2531 = int_to_ptr.vmem [resolvable:$true] %s2530
          %s2532 = sshll.u32 %s2528, 4
          %s2533 = int_to_ptr.hbm [resolvable:$true] %s2532
          %2535 = dma.vmem_to_hbm [thread:$0]  %s2531, 128, %s2533, %s2518
        $region48: #{tpu_custom_call.1} parent=43 // pred_fallthru
          _
      $region44: #{tpu_custom_call.1} parent=5 // pred_fallthru
        _
      %p2536 = scmp.le.s32.totalorder 2, %s15
      // Predicated region
      $region49: #{tpu_custom_call.1} parent=5 // pred_check
        %p2537 = pneg %p2536
      $region50: #{tpu_custom_call.1} parent=5 // pred_check_branch
        %2539 = sbr.rel (%p2537) target = $region52
      $region51: #{tpu_custom_call.1} parent=5 // pred_region
        %s2540 = ssub.s32 %s15, 2
        // Predicated region
        $region53: #{tpu_custom_call.1} parent=51 // pred_check
          %p2541 = pneg %p190
        $region54: #{tpu_custom_call.1} parent=51 // pred_check_branch
          %2543 = sbr.rel (%p2541) target = $region56
        $region55: #{tpu_custom_call.1} parent=51 // pred_region
          %s2544 = sand.u32 %s175, 1
          %s2545 = scalar_lea.sflag [#allocation3], %s2544
          %s2546 = sand.u32 %s175, 1
          %s2547 = smul.addr %s2546, 8
          %s2548 = scalar_lea.vmem [#allocation2], %s2547
          %2550 = dma.done %s2545, 128
        $region56: #{tpu_custom_call.1} parent=51 // pred_fallthru
          _
      $region52: #{tpu_custom_call.1} parent=5 // pred_fallthru
        _
    $region6: #{tpu_custom_call.1} parent=1 // loop_footer
      %s19 = sadd.s32 1, %s15
    $region7: #{tpu_custom_call.1} parent=1 // loop_footer_branch
      %14 = sbr.rel target = $region3
    $region8: #{tpu_custom_call.1} parent=1 // loop_exit
      _
    %2551 = vsyncpa [#allocation3], 1
    %s2552 = scalar_lea.sflag [#allocation3], 1
    %2553 = vsyncpa %s2552, 1

</llo_original>
